<compile_context>
chip_gen: v7x
topology: tpu7x:2x2x1
jax: 0.10.0
libtpu: 0.0.40
codegen_flags: <defaults>
</compile_context>

<pallas_src>
import functools

import jax
import jax.numpy as jnp
from jax.experimental import pallas as pl
from jax.experimental.pallas import tpu as pltpu


# ----------------------------- Pallas kernels ------------------------------

def _cv124_bn1_kernel(x_ref, w124_ref, s124_ref, b124_ref,
                      wb1_ref, sb1_ref, bb1_ref,
                      z13_ref, y2_ref, b1_ref, *, h):
    """Fused 1x1 ConvBNSiLU for [cv2 | cv4 | cv1] + Bottleneck 1x1 ConvBNSiLU."""
    z = jnp.dot(x_ref[...], w124_ref[...], preferred_element_type=jnp.float32)
    z = z * s124_ref[...] + b124_ref[...]
    z = z * jax.nn.sigmoid(z)                       # SiLU
    z13_ref[...] = z[:, :2 * h]                     # [y1 | y3]
    y2 = z[:, 2 * h:]                               # cv1(x)
    y2_ref[...] = y2
    b1 = jnp.dot(y2, wb1_ref[...], preferred_element_type=jnp.float32)
    b1 = b1 * sb1_ref[...] + bb1_ref[...]
    b1_ref[...] = b1 * jax.nn.sigmoid(b1)           # bottleneck cv1 output


def _cbam_attend(x_flat, fc1, fc2, sconv_ref, cm_pad_ref, cx_pad_ref, H, W):
    """Standard CBAM on a resident (HW, C) tile.  Returns attended (HW, C).

    fc1/fc2 are (hr, C) values (channel-attention MLP, done with broadcast +
    reduce so no degenerate MXU matmuls).  sconv_ref is an SMEM (98,) ref with
    the 7x7 spatial-conv weights [49 avg-weights | 49 max-weights].  The two
    scratch refs hold zero-padded channel-mean / channel-max maps; data is
    stored at sublane offset 8 so the store stays (8,128)-aligned.
    """
    HW, C = x_flat.shape

    # --- channel attention ---
    avg = jnp.mean(x_flat, axis=0, keepdims=True)               # (1, C)
    mx = jnp.max(x_flat, axis=0, keepdims=True)                 # (1, C)

    def mlp(v):                                                  # (1, C) -> (1, C)
        t = jnp.maximum(jnp.sum(v * fc1, axis=1, keepdims=True), 0.0)   # (hr, 1)
        return jnp.sum(t * fc2, axis=0, keepdims=True)                  # (1, C)

    ca = jax.nn.sigmoid(mlp(avg) + mlp(mx))                      # (1, C)
    x1 = x_flat * ca                                             # (HW, C)

    # --- spatial attention: 7x7 conv on [channel-mean, channel-max] ---
    x1_3 = x1.reshape(H, W, C)
    cm = jnp.mean(x1_3, axis=2, keepdims=True)                   # (H, W, 1)
    cx = jnp.max(x1_3, axis=2, keepdims=True)                    # (H, W, 1)

    cm_pad_ref[...] = jnp.zeros_like(cm_pad_ref)
    cx_pad_ref[...] = jnp.zeros_like(cx_pad_ref)
    cm_pad_ref[3:3 + H, 8:8 + W, :] = cm                         # aligned store
    cx_pad_ref[3:3 + H, 8:8 + W, :] = cx

    sacc = jnp.zeros((H, W, 1), jnp.float32)
    for kk in range(49):                                         # 7x7, pad 3
        di, dj = divmod(kk, 7)
        w_avg = sconv_ref[kk]
        w_max = sconv_ref[49 + kk]
        sacc = (sacc
                + w_avg * cm_pad_ref[di:di + H, 5 + dj:5 + dj + W, :]
                + w_max * cx_pad_ref[di:di + H, 5 + dj:5 + dj + W, :])
    sa = jax.nn.sigmoid(sacc)                                    # (H, W, 1)
    return (x1_3 * sa).reshape(HW, C)


def _c2f_tail_kernel(y2_ref, b1_ref, z13_ref,
                     wc_ref, sc_ref, bc_ref,
                     fc1b_ref, fc2b_ref,
                     w3_ref, s3_ref, b3_ref,
                     w5a_ref, w5b_ref, s5_ref, b5_ref,
                     fc1o_ref, fc2o_ref,
                     sconvb_ref, sconvo_ref,
                     o_ref,
                     pad3_ref, cm_pad_ref, cx_pad_ref,
                     *, H, W, h):
    """Per-batch: 3x3 conv + residual + CBAM + cv3 + cv5(accum) + outer CBAM."""
    HW = H * W

    # ---- Bottleneck 3x3 ConvBNSiLU: 9 shifted MXU matmuls, no im2col ----
    pad3_ref[...] = jnp.zeros_like(pad3_ref)
    pad3_ref[1:1 + H, 8:8 + W, :] = b1_ref[0]        # (8,128)-aligned store
    acc = jnp.zeros((HW, h), jnp.float32)
    for ki in range(9):
        di, dj = divmod(ki, 3)
        patch = pad3_ref[di:di + H, 7 + dj:7 + dj + W, :].reshape(HW, h)
        acc = acc + jnp.dot(patch, wc_ref[ki], preferred_element_type=jnp.float32)
    conv = acc * sc_ref[...] + bc_ref[...]
    conv = conv * jax.nn.sigmoid(conv)

    # ---- residual add + bottleneck CBAM (all resident in VMEM) ----
    yb = y2_ref[0].reshape(HW, h) + conv
    yb = _cbam_attend(yb, fc1b_ref[...], fc2b_ref[...], sconvb_ref,
                      cm_pad_ref, cx_pad_ref, H, W)

    # ---- cv3 (1x1 ConvBNSiLU) ----
    y2c = jnp.dot(yb, w3_ref[...], preferred_element_type=jnp.float32)
    y2c = y2c * s3_ref[...] + b3_ref[...]
    y2c = y2c * jax.nn.sigmoid(y2c)

    # ---- cv5 on the implicit concat [y1 | y2c | y3] (row-split accumulation) ----
    z13 = z13_ref[0].reshape(HW, 2 * h)
    out = (jnp.dot(z13, w5a_ref[...], preferred_element_type=jnp.float32)
           + jnp.dot(y2c, w5b_ref[...], preferred_element_type=jnp.float32))
    out = out * s5_ref[...] + b5_ref[...]
    out = out * jax.nn.sigmoid(out)

    # ---- outer CBAM, single HBM writeback ----
    out = _cbam_attend(out, fc1o_ref[...], fc2o_ref[...], sconvo_ref,
                       cm_pad_ref, cx_pad_ref, H, W)
    o_ref[0] = out.reshape(H, W, out.shape[1])


# ------------------------------ call wrappers --------------------------------

_VMEM_LIMIT = 48 * 1024 * 1024


def _round_up(x, m):
    return pl.cdiv(x, m) * m


def fused_cv124_bn1(xf, P, tile_m=1024):
    """Kernel A: big-tile fused 1x1 convs over the flattened (M, Cin) view."""
    M, cin = xf.shape
    h = P["hidden"]
    tm = min(tile_m, _round_up(M, 8))
    Mp = _round_up(M, tm)
    if Mp != M:
        xf = jnp.pad(xf, ((0, Mp - M), (0, 0)))
    kern = functools.partial(_cv124_bn1_kernel, h=h)
    z13, y2, b1 = pl.pallas_call(
        kern,
        out_shape=(jax.ShapeDtypeStruct((Mp, 2 * h), jnp.float32),
                   jax.ShapeDtypeStruct((Mp, h), jnp.float32),
                   jax.ShapeDtypeStruct((Mp, h), jnp.float32)),
        grid=(Mp // tm,),
        in_specs=[
            pl.BlockSpec((tm, cin), lambda i: (i, 0)),
            pl.BlockSpec((cin, 3 * h), lambda i: (0, 0)),
            pl.BlockSpec((1, 3 * h), lambda i: (0, 0)),
            pl.BlockSpec((1, 3 * h), lambda i: (0, 0)),
            pl.BlockSpec((h, h), lambda i: (0, 0)),
            pl.BlockSpec((1, h), lambda i: (0, 0)),
            pl.BlockSpec((1, h), lambda i: (0, 0)),
        ],
        out_specs=(pl.BlockSpec((tm, 2 * h), lambda i: (i, 0)),
                   pl.BlockSpec((tm, h), lambda i: (i, 0)),
                   pl.BlockSpec((tm, h), lambda i: (i, 0))),
        compiler_params=pltpu.CompilerParams(
            dimension_semantics=("parallel",),
            vmem_limit_bytes=_VMEM_LIMIT),
    )(xf, P["w124"], P["s124"], P["b124"],
      P["bn_cv1"]["w"], P["bn_cv1"]["s"], P["bn_cv1"]["b"])
    if Mp != M:
        z13, y2, b1 = z13[:M], y2[:M], b1[:M]
    return z13, y2, b1


def c2f_tail(z13, y2, b1, P, H, W):
    """Kernel B: everything downstream of the fused 1x1s, gridded over batch."""
    N = z13.shape[0]
    h = P["hidden"]
    cout = P["s5"].shape[1]
    kern = functools.partial(_c2f_tail_kernel, H=H, W=W, h=h)

    def full(shape):
        return pl.BlockSpec(shape, lambda n, _s=shape: (0,) * len(_s))

    smem = pl.BlockSpec(memory_space=pltpu.MemorySpace.SMEM)

    return pl.pallas_call(
        kern,
        out_shape=jax.ShapeDtypeStruct((N, H, W, cout), jnp.float32),
        grid=(N,),
        in_specs=[
            pl.BlockSpec((1, H, W, h), lambda n: (n, 0, 0, 0)),        # y2
            pl.BlockSpec((1, H, W, h), lambda n: (n, 0, 0, 0)),        # b1
            pl.BlockSpec((1, H, W, 2 * h), lambda n: (n, 0, 0, 0)),    # z13
            full((9, h, h)),                                           # 3x3 weights
            full((1, h)), full((1, h)),                                # 3x3 bn
            full(P["bn_cbam"]["fc1"].shape), full(P["bn_cbam"]["fc2"].shape),
            full((h, h)), full((1, h)), full((1, h)),                  # cv3
            full((2 * h, cout)), full((h, cout)),                      # cv5 split
            full((1, cout)), full((1, cout)),                          # cv5 bn
            full(P["att_cbam"]["fc1"].shape), full(P["att_cbam"]["fc2"].shape),
            smem, smem,                                                # 7x7 weights
        ],
        out_specs=pl.BlockSpec((1, H, W, cout), lambda n: (n, 0, 0, 0)),
        scratch_shapes=[
            pltpu.VMEM((H + 2, W + 16, h), jnp.float32),   # padded 3x3 input
            pltpu.VMEM((H + 6, W + 16, 1), jnp.float32),   # padded channel-mean map
            pltpu.VMEM((H + 6, W + 16, 1), jnp.float32),   # padded channel-max map
        ],
        compiler_params=pltpu.CompilerParams(
            dimension_semantics=("parallel",),
            vmem_limit_bytes=_VMEM_LIMIT),
    )(y2, b1, z13,
      P["bn_cv2"]["w"], P["bn_cv2"]["s"], P["bn_cv2"]["b"],
      P["bn_cbam"]["fc1"], P["bn_cbam"]["fc2"],
      P["cv3"]["w"], P["cv3"]["s"], P["cv3"]["b"],
      P["w5a"], P["w5b"], P["s5"], P["b5"],
      P["att_cbam"]["fc1"], P["att_cbam"]["fc2"],
      P["bn_cbam"]["sconv"], P["att_cbam"]["sconv"])


# ----------------------------- parameter setup ------------------------------

def make_convbn(key, cin, cout, k):
    """Conv2d(kxk, bias=False) + BatchNorm2d (eval mode), BN folded to affine."""
    k1, k2, k3, k4, k5 = jax.random.split(key, 5)
    w = jax.random.normal(k1, (cout, cin, k, k), jnp.float32) * 0.1   # torch OIHW
    gamma = 1.0 + 0.1 * jax.random.normal(k2, (cout,), jnp.float32)
    beta = 0.1 * jax.random.normal(k3, (cout,), jnp.float32)
    rmean = 0.1 * jax.random.normal(k4, (cout,), jnp.float32)
    rvar = 1.0 + 0.1 * jax.random.uniform(k5, (cout,), jnp.float32)
    eps = 1e-5
    scale = gamma / jnp.sqrt(rvar + eps)
    bias = beta - rmean * scale
    if k == 1:
        wm = w.reshape(cout, cin).T                                    # (cin, cout)
    else:
        wm = jnp.transpose(w, (2, 3, 1, 0)).reshape(k * k, cin, cout)  # per-offset
    return dict(w=wm, s=scale.reshape(1, cout), b=bias.reshape(1, cout))


def make_cbam(key, c, ratio):
    k1, k2, k3 = jax.random.split(key, 3)
    cr = max(c // ratio, 1)
    fc1 = jax.random.normal(k1, (cr, c), jnp.float32) * 0.1     # torch Conv2d(c, cr, 1)
    fc2 = jax.random.normal(k2, (c, cr), jnp.float32) * 0.1     # torch Conv2d(cr, c, 1)
    sconv = jax.random.normal(k3, (1, 2, 7, 7), jnp.float32) * 0.1
    return dict(fc1=fc1,                   # (cr, c)
                fc2=fc2.T,                 # (cr, c)
                sconv=sconv.reshape(98))   # [49 avg-weights | 49 max-weights]


def make_params(key, cin, cout, ratio=16, expansion=0.5):
    h = int(cout * expansion)
    ks = jax.random.split(key, 9)
    cv1 = make_convbn(ks[0], cin, h, 1)
    cv2 = make_convbn(ks[1], cin, h, 1)
    cv3 = make_convbn(ks[2], h, h, 1)
    cv4 = make_convbn(ks[3], cin, h, 1)
    cv5 = make_convbn(ks[4], 3 * h, cout, 1)
    bn_cv1 = make_convbn(ks[5], h, h, 1)      # Bottleneck expansion=1.0
    bn_cv2 = make_convbn(ks[6], h, h, 3)
    bn_cbam = make_cbam(ks[7], h, ratio)
    att_cbam = make_cbam(ks[8], cout, ratio)

    # cv2 | cv4 | cv1 fused column-wise -> fused output columns are [y1 | y3 | y2].
    w124 = jnp.concatenate([cv2["w"], cv4["w"], cv1["w"]], axis=1)
    s124 = jnp.concatenate([cv2["s"], cv4["s"], cv1["s"]], axis=1)
    b124 = jnp.concatenate([cv2["b"], cv4["b"], cv1["b"]], axis=1)

    # cv5 weight split by input rows so torch.cat([y1, y2, y3]) never materializes.
    w5 = cv5["w"]                                               # (3h, cout)
    w5a = jnp.concatenate([w5[:h], w5[2 * h:]], axis=0)         # rows for [y1 | y3]
    w5b = w5[h:2 * h]                                           # rows for y2 (cv3 out)

    return dict(hidden=h, w124=w124, s124=s124, b124=b124,
                bn_cv1=bn_cv1, bn_cv2=bn_cv2, bn_cbam=bn_cbam,
                cv3=cv3, w5a=w5a, w5b=w5b, s5=cv5["s"], b5=cv5["b"],
                att_cbam=att_cbam)


# ------------------------------- forward pass -------------------------------

def c2f_with_attention_forward(x, P):
    N, H, W, cin = x.shape
    h = P["hidden"]
    xf = x.reshape(N * H * W, cin)

    # Kernel A: fused cv1/cv2/cv4 + bottleneck 1x1.
    z13, y2, b1 = fused_cv124_bn1(xf, P)

    # Free reshapes back to NHWC for the per-batch spatial kernel.
    z13 = z13.reshape(N, H, W, 2 * h)
    y2 = y2.reshape(N, H, W, h)
    b1 = b1.reshape(N, H, W, h)

    # Kernel B: 3x3 conv + residual + CBAM + cv3 + cv5 + outer CBAM.
    return c2f_tail(z13, y2, b1, P, H, W)


# ---------------------------------- main -------------------------------------

if __name__ == "__main__":
    key = jax.random.PRNGKey(0)
    kx, kp = jax.random.split(key)

    N, H, W = 2, 16, 16
    in_channels, out_channels = 32, 32                            # hidden = 16

    x = jax.random.normal(kx, (N, H, W, in_channels), jnp.float32)
    params = make_params(kp, in_channels, out_channels, ratio=16, expansion=0.5)

    out = c2f_with_attention_forward(x, params)
    out = jax.block_until_ready(out)
    assert out.shape == (N, H, W, out_channels)
    assert bool(jnp.all(jnp.isfinite(out)))
    print("KERNEL_OK")
</pallas_src>

<mosaic_0001>
module attributes {stable_mosaic.version = 11 : i64} {
  func.func @_cv124_bn1_kernel(%arg0: i32, %arg1: memref<512x32xf32, #tpu.memory_space<vmem>>, %arg2: memref<32x48xf32, #tpu.memory_space<vmem>>, %arg3: memref<1x48xf32, #tpu.memory_space<vmem>>, %arg4: memref<1x48xf32, #tpu.memory_space<vmem>>, %arg5: memref<16x16xf32, #tpu.memory_space<vmem>>, %arg6: memref<1x16xf32, #tpu.memory_space<vmem>>, %arg7: memref<1x16xf32, #tpu.memory_space<vmem>>, %arg8: memref<512x32xf32, #tpu.memory_space<vmem>>, %arg9: memref<512x16xf32, #tpu.memory_space<vmem>>, %arg10: memref<512x16xf32, #tpu.memory_space<vmem>>) attributes {dimension_semantics = [#tpu.dimension_semantics<parallel>], iteration_bounds = array<i64: 1>, scalar_prefetch = 0 : i64, scratch_operands = 0 : i64, tpu.core_type = #tpu.core_type<tc>, window_params = [{transform_indices = @transform_0, window_bounds = array<i64: 512, 32>}, {pipeline_mode = #tpu.pipeline_mode<synchronous>, transform_indices = @transform_1, window_bounds = array<i64: 32, 48>}, {pipeline_mode = #tpu.pipeline_mode<synchronous>, transform_indices = @transform_2, window_bounds = array<i64: 1, 48>}, {pipeline_mode = #tpu.pipeline_mode<synchronous>, transform_indices = @transform_3, window_bounds = array<i64: 1, 48>}, {pipeline_mode = #tpu.pipeline_mode<synchronous>, transform_indices = @transform_4, window_bounds = array<i64: 16, 16>}, {pipeline_mode = #tpu.pipeline_mode<synchronous>, transform_indices = @transform_5, window_bounds = array<i64: 1, 16>}, {pipeline_mode = #tpu.pipeline_mode<synchronous>, transform_indices = @transform_6, window_bounds = array<i64: 1, 16>}, {transform_indices = @transform_7, window_bounds = array<i64: 512, 32>}, {transform_indices = @transform_8, window_bounds = array<i64: 512, 16>}, {transform_indices = @transform_9, window_bounds = array<i64: 512, 16>}]} {
    %c0 = arith.constant 0 : index
    %c0_0 = arith.constant 0 : index
    %0 = vector.load %arg1[%c0, %c0_0] : memref<512x32xf32, #tpu.memory_space<vmem>>, vector<512x32xf32>
    %c0_1 = arith.constant 0 : index
    %c0_2 = arith.constant 0 : index
    %1 = vector.load %arg2[%c0_1, %c0_2] : memref<32x48xf32, #tpu.memory_space<vmem>>, vector<32x48xf32>
    %cst = arith.constant dense<0.000000e+00> : vector<512x48xf32>
    %2 = tpu.matmul %0, %1, %cst {dimension_numbers = #tpu.dot_dimension_numbers<[1], [0], [0], [1], [0, 0, 1, 1], [], []>} : vector<512x32xf32>, vector<32x48xf32>, vector<512x48xf32> -> vector<512x48xf32>
    %c0_3 = arith.constant 0 : index
    %c0_4 = arith.constant 0 : index
    %3 = vector.load %arg3[%c0_3, %c0_4] : memref<1x48xf32, #tpu.memory_space<vmem>>, vector<1x48xf32>
    %4 = vector.broadcast %3 : vector<1x48xf32> to vector<512x48xf32>
    %5 = arith.mulf %2, %4 : vector<512x48xf32>
    %c0_5 = arith.constant 0 : index
    %c0_6 = arith.constant 0 : index
    %6 = vector.load %arg4[%c0_5, %c0_6] : memref<1x48xf32, #tpu.memory_space<vmem>>, vector<1x48xf32>
    %7 = vector.broadcast %6 : vector<1x48xf32> to vector<512x48xf32>
    %8 = arith.addf %5, %7 : vector<512x48xf32>
    %9 = arith.negf %8 : vector<512x48xf32>
    %10 = math.exp %9 : vector<512x48xf32>
    %cst_7 = arith.constant 1.000000e+00 : f32
    %11 = vector.broadcast %cst_7 : f32 to vector<512x48xf32>
    %12 = arith.addf %11, %10 : vector<512x48xf32>
    %13 = arith.divf %11, %12 : vector<512x48xf32>
    %14 = arith.mulf %8, %13 : vector<512x48xf32>
    %15 = vector.extract_strided_slice %14 {offsets = [0, 0], sizes = [512, 32], strides = [1, 1]} : vector<512x48xf32> to vector<512x32xf32>
    %c0_8 = arith.constant 0 : index
    %c0_9 = arith.constant 0 : index
    %16 = vector.load %arg8[%c0_8, %c0_9] : memref<512x32xf32, #tpu.memory_space<vmem>>, vector<512x32xf32>
    tpu.vector_store %arg8[%c0_8, %c0_9], %15 {strides = array<i32>} : memref<512x32xf32, #tpu.memory_space<vmem>>, vector<512x32xf32>,
    %17 = vector.extract_strided_slice %14 {offsets = [0, 32], sizes = [512, 16], strides = [1, 1]} : vector<512x48xf32> to vector<512x16xf32>
    %c0_10 = arith.constant 0 : index
    %c0_11 = arith.constant 0 : index
    %18 = vector.load %arg9[%c0_10, %c0_11] : memref<512x16xf32, #tpu.memory_space<vmem>>, vector<512x16xf32>
    tpu.vector_store %arg9[%c0_10, %c0_11], %17 {strides = array<i32>} : memref<512x16xf32, #tpu.memory_space<vmem>>, vector<512x16xf32>,
    %c0_12 = arith.constant 0 : index
    %c0_13 = arith.constant 0 : index
    %19 = vector.load %arg5[%c0_12, %c0_13] : memref<16x16xf32, #tpu.memory_space<vmem>>, vector<16x16xf32>
    %cst_14 = arith.constant dense<0.000000e+00> : vector<512x16xf32>
    %20 = tpu.matmul %17, %19, %cst_14 {dimension_numbers = #tpu.dot_dimension_numbers<[1], [0], [0], [1], [0, 0, 1, 1], [], []>} : vector<512x16xf32>, vector<16x16xf32>, vector<512x16xf32> -> vector<512x16xf32>
    %c0_15 = arith.constant 0 : index
    %c0_16 = arith.constant 0 : index
    %21 = vector.load %arg6[%c0_15, %c0_16] : memref<1x16xf32, #tpu.memory_space<vmem>>, vector<1x16xf32>
    %22 = vector.broadcast %21 : vector<1x16xf32> to vector<512x16xf32>
    %23 = arith.mulf %20, %22 : vector<512x16xf32>
    %c0_17 = arith.constant 0 : index
    %c0_18 = arith.constant 0 : index
    %24 = vector.load %arg7[%c0_17, %c0_18] : memref<1x16xf32, #tpu.memory_space<vmem>>, vector<1x16xf32>
    %25 = vector.broadcast %24 : vector<1x16xf32> to vector<512x16xf32>
    %26 = arith.addf %23, %25 : vector<512x16xf32>
    %27 = arith.negf %26 : vector<512x16xf32>
    %28 = math.exp %27 : vector<512x16xf32>
    %cst_19 = arith.constant 1.000000e+00 : f32
    %29 = vector.broadcast %cst_19 : f32 to vector<512x16xf32>
    %30 = arith.addf %29, %28 : vector<512x16xf32>
    %31 = arith.divf %29, %30 : vector<512x16xf32>
    %32 = arith.mulf %26, %31 : vector<512x16xf32>
    %c0_20 = arith.constant 0 : index
    %c0_21 = arith.constant 0 : index
    %33 = vector.load %arg10[%c0_20, %c0_21] : memref<512x16xf32, #tpu.memory_space<vmem>>, vector<512x16xf32>
    tpu.vector_store %arg10[%c0_20, %c0_21], %32 {strides = array<i32>} : memref<512x16xf32, #tpu.memory_space<vmem>>, vector<512x16xf32>,
    return
  }
  func.func @transform_0(%arg0: i32) -> (i32, i32) {
    %c0_i32 = arith.constant 0 : i32
    %c0_i32_0 = arith.constant 0 : i32
    return %arg0, %c0_i32 : i32, i32
  }
  func.func @transform_1(%arg0: i32) -> (i32, i32) {
    %c0_i32 = arith.constant 0 : i32
    %c0_i32_0 = arith.constant 0 : i32
    %c0_i32_1 = arith.constant 0 : i32
    return %c0_i32, %c0_i32_0 : i32, i32
  }
  func.func @transform_2(%arg0: i32) -> (i32, i32) {
    %c0_i32 = arith.constant 0 : i32
    %c0_i32_0 = arith.constant 0 : i32
    %c0_i32_1 = arith.constant 0 : i32
    return %c0_i32, %c0_i32_0 : i32, i32
  }
  func.func @transform_3(%arg0: i32) -> (i32, i32) {
    %c0_i32 = arith.constant 0 : i32
    %c0_i32_0 = arith.constant 0 : i32
    %c0_i32_1 = arith.constant 0 : i32
    return %c0_i32, %c0_i32_0 : i32, i32
  }
  func.func @transform_4(%arg0: i32) -> (i32, i32) {
    %c0_i32 = arith.constant 0 : i32
    %c0_i32_0 = arith.constant 0 : i32
    %c0_i32_1 = arith.constant 0 : i32
    return %c0_i32, %c0_i32_0 : i32, i32
  }
  func.func @transform_5(%arg0: i32) -> (i32, i32) {
    %c0_i32 = arith.constant 0 : i32
    %c0_i32_0 = arith.constant 0 : i32
    %c0_i32_1 = arith.constant 0 : i32
    return %c0_i32, %c0_i32_0 : i32, i32
  }
  func.func @transform_6(%arg0: i32) -> (i32, i32) {
    %c0_i32 = arith.constant 0 : i32
    %c0_i32_0 = arith.constant 0 : i32
    %c0_i32_1 = arith.constant 0 : i32
    return %c0_i32, %c0_i32_0 : i32, i32
  }
  func.func @transform_7(%arg0: i32) -> (i32, i32) {
    %c0_i32 = arith.constant 0 : i32
    %c0_i32_0 = arith.constant 0 : i32
    return %arg0, %c0_i32 : i32, i32
  }
  func.func @transform_8(%arg0: i32) -> (i32, i32) {
    %c0_i32 = arith.constant 0 : i32
    %c0_i32_0 = arith.constant 0 : i32
    return %arg0, %c0_i32 : i32, i32
  }
  func.func @transform_9(%arg0: i32) -> (i32, i32) {
    %c0_i32 = arith.constant 0 : i32
    %c0_i32_0 = arith.constant 0 : i32
    return %arg0, %c0_i32 : i32, i32
  }
}

</mosaic_0001>

<llo_original>
// kernel: tpu_custom_call.1
$region0: #{tpu_custom_call.1}
  #allocation0 [shape = 'u32[]', space=smem, size = 0x4, offset = 0x4, fixed_abs, tag = 'smem constant byte address 0x4 - core index']
  #allocation1 [shape = 'u32[144,128]{1,0:T(1,128)}', space=vmem, size = 0x12000, scoped, tag = 'internal scratch']
  %s0 = inlined_call_operand.vmem [shape: f32[512,32], index: 0, kind: input, shape index: {}]
  %s1 = inlined_call_operand.vmem [shape: f32[32,48], index: 1, kind: input, shape index: {}]
  %s2 = inlined_call_operand.vmem [shape: f32[1,48], index: 2, kind: input, shape index: {}]
  %s3 = inlined_call_operand.vmem [shape: f32[1,48], index: 3, kind: input, shape index: {}]
  %s4 = inlined_call_operand.vmem [shape: f32[16,16], index: 4, kind: input, shape index: {}]
  %s5 = inlined_call_operand.vmem [shape: f32[1,16], index: 5, kind: input, shape index: {}]
  %s6 = inlined_call_operand.vmem [shape: f32[1,16], index: 6, kind: input, shape index: {}]
  %s7 = inlined_call_operand.vmem [shape: f32[512,32], index: 7, kind: output, shape index: {0}]
  %s8 = inlined_call_operand.vmem [shape: f32[512,16], index: 8, kind: output, shape index: {1}]
  %s9 = inlined_call_operand.vmem [shape: f32[512,16], index: 9, kind: output, shape index: {2}]
  %10 = xla_tuple %s7, %s8, %s9
  %s11 = sld [smem:[#allocation0]]
  $region54: #{tpu_custom_call.1} parent=0
    _
  %s13 = ssub.s32 1, %s11
  %s14 = scalar_select 0, %s13, %s11
  // Predicated region
  $region2: #{tpu_custom_call.1} parent=0 // pred_check
    _
  $region3: #{tpu_custom_call.1} parent=0 // pred_check_branch
    %16 = sbr.rel (0) target = $region5
  $region4: #{tpu_custom_call.1} parent=0 // pred_region
    _
  $region5: #{tpu_custom_call.1} parent=0 // pred_fallthru
    _
  // Predicated region
  $region6: #{tpu_custom_call.1} parent=0 // pred_check
    _
  $region7: #{tpu_custom_call.1} parent=0 // pred_check_branch
    %18 = sbr.rel (0) target = $region9
  $region8: #{tpu_custom_call.1} parent=0 // pred_region
    _
  $region9: #{tpu_custom_call.1} parent=0 // pred_fallthru
    _
  // Predicated region
  $region10: #{tpu_custom_call.1} parent=0 // pred_check
    _
  $region11: #{tpu_custom_call.1} parent=0 // pred_check_branch
    %20 = sbr.rel (0) target = $region13
  $region12: #{tpu_custom_call.1} parent=0 // pred_region
    _
  $region13: #{tpu_custom_call.1} parent=0 // pred_fallthru
    _
  // Predicated region
  $region14: #{tpu_custom_call.1} parent=0 // pred_check
    _
  $region15: #{tpu_custom_call.1} parent=0 // pred_check_branch
    %22 = sbr.rel (0) target = $region17
  $region16: #{tpu_custom_call.1} parent=0 // pred_region
    _
  $region17: #{tpu_custom_call.1} parent=0 // pred_fallthru
    _
  // Predicated region
  $region18: #{tpu_custom_call.1} parent=0 // pred_check
    _
  $region19: #{tpu_custom_call.1} parent=0 // pred_check_branch
    %24 = sbr.rel (0) target = $region21
  $region20: #{tpu_custom_call.1} parent=0 // pred_region
    _
  $region21: #{tpu_custom_call.1} parent=0 // pred_fallthru
    _
  // Predicated region
  $region22: #{tpu_custom_call.1} parent=0 // pred_check
    _
  $region23: #{tpu_custom_call.1} parent=0 // pred_check_branch
    %26 = sbr.rel (0) target = $region25
  $region24: #{tpu_custom_call.1} parent=0 // pred_region
    _
  $region25: #{tpu_custom_call.1} parent=0 // pred_fallthru
    _
  // Predicated region
  $region26: #{tpu_custom_call.1} parent=0 // pred_check
    _
  $region27: #{tpu_custom_call.1} parent=0 // pred_check_branch
    %28 = sbr.rel (0) target = $region29
  $region28: #{tpu_custom_call.1} parent=0 // pred_region
    _
  $region29: #{tpu_custom_call.1} parent=0 // pred_fallthru
    _
  %v29 = vld [vmem:[%s0] sm:$0xff]
  %v30 = vld [vmem:[%s0 + $0x8] sm:$0xff]
  %v31 = vld [vmem:[%s0 + $0x10] sm:$0xff]
  %v32 = vld [vmem:[%s0 + $0x18] sm:$0xff]
  %v33 = vld [vmem:[%s0 + $0x20] sm:$0xff]
  %v34 = vld [vmem:[%s0 + $0x28] sm:$0xff]
  %v35 = vld [vmem:[%s0 + $0x30] sm:$0xff]
  %v36 = vld [vmem:[%s0 + $0x38] sm:$0xff]
  %v37 = vld [vmem:[%s0 + $0x40] sm:$0xff]
  %v38 = vld [vmem:[%s0 + $0x48] sm:$0xff]
  %v39 = vld [vmem:[%s0 + $0x50] sm:$0xff]
  %v40 = vld [vmem:[%s0 + $0x58] sm:$0xff]
  %v41 = vld [vmem:[%s0 + $0x60] sm:$0xff]
  %v42 = vld [vmem:[%s0 + $0x68] sm:$0xff]
  %v43 = vld [vmem:[%s0 + $0x70] sm:$0xff]
  %v44 = vld [vmem:[%s0 + $0x78] sm:$0xff]
  %v45 = vld [vmem:[%s0 + $0x80] sm:$0xff]
  %v46 = vld [vmem:[%s0 + $0x88] sm:$0xff]
  %v47 = vld [vmem:[%s0 + $0x90] sm:$0xff]
  %v48 = vld [vmem:[%s0 + $0x98] sm:$0xff]
  %v49 = vld [vmem:[%s0 + $0xa0] sm:$0xff]
  %v50 = vld [vmem:[%s0 + $0xa8] sm:$0xff]
  %v51 = vld [vmem:[%s0 + $0xb0] sm:$0xff]
  %v52 = vld [vmem:[%s0 + $0xb8] sm:$0xff]
  %v53 = vld [vmem:[%s0 + $0xc0] sm:$0xff]
  %v54 = vld [vmem:[%s0 + $0xc8] sm:$0xff]
  %v55 = vld [vmem:[%s0 + $0xd0] sm:$0xff]
  %v56 = vld [vmem:[%s0 + $0xd8] sm:$0xff]
  %v57 = vld [vmem:[%s0 + $0xe0] sm:$0xff]
  %v58 = vld [vmem:[%s0 + $0xe8] sm:$0xff]
  %v59 = vld [vmem:[%s0 + $0xf0] sm:$0xff]
  %v60 = vld [vmem:[%s0 + $0xf8] sm:$0xff]
  %v61 = vld [vmem:[%s0 + $0x100] sm:$0xff]
  %v62 = vld [vmem:[%s0 + $0x108] sm:$0xff]
  %v63 = vld [vmem:[%s0 + $0x110] sm:$0xff]
  %v64 = vld [vmem:[%s0 + $0x118] sm:$0xff]
  %v65 = vld [vmem:[%s0 + $0x120] sm:$0xff]
  %v66 = vld [vmem:[%s0 + $0x128] sm:$0xff]
  %v67 = vld [vmem:[%s0 + $0x130] sm:$0xff]
  %v68 = vld [vmem:[%s0 + $0x138] sm:$0xff]
  %v69 = vld [vmem:[%s0 + $0x140] sm:$0xff]
  %v70 = vld [vmem:[%s0 + $0x148] sm:$0xff]
  %v71 = vld [vmem:[%s0 + $0x150] sm:$0xff]
  %v72 = vld [vmem:[%s0 + $0x158] sm:$0xff]
  %v73 = vld [vmem:[%s0 + $0x160] sm:$0xff]
  %v74 = vld [vmem:[%s0 + $0x168] sm:$0xff]
  %v75 = vld [vmem:[%s0 + $0x170] sm:$0xff]
  %v76 = vld [vmem:[%s0 + $0x178] sm:$0xff]
  %v77 = vld [vmem:[%s0 + $0x180] sm:$0xff]
  %v78 = vld [vmem:[%s0 + $0x188] sm:$0xff]
  %v79 = vld [vmem:[%s0 + $0x190] sm:$0xff]
  %v80 = vld [vmem:[%s0 + $0x198] sm:$0xff]
  %v81 = vld [vmem:[%s0 + $0x1a0] sm:$0xff]
  %v82 = vld [vmem:[%s0 + $0x1a8] sm:$0xff]
  %v83 = vld [vmem:[%s0 + $0x1b0] sm:$0xff]
  %v84 = vld [vmem:[%s0 + $0x1b8] sm:$0xff]
  %v85 = vld [vmem:[%s0 + $0x1c0] sm:$0xff]
  %v86 = vld [vmem:[%s0 + $0x1c8] sm:$0xff]
  %v87 = vld [vmem:[%s0 + $0x1d0] sm:$0xff]
  %v88 = vld [vmem:[%s0 + $0x1d8] sm:$0xff]
  %v89 = vld [vmem:[%s0 + $0x1e0] sm:$0xff]
  %v90 = vld [vmem:[%s0 + $0x1e8] sm:$0xff]
  %v91 = vld [vmem:[%s0 + $0x1f0] sm:$0xff]
  %v92 = vld [vmem:[%s0 + $0x1f8] sm:$0xff]
  %v93 = vld [vmem:[%s1] sm:$0xff]
  %v94 = vld [vmem:[%s1 + $0x8] sm:$0xff]
  %v95 = vld [vmem:[%s1 + $0x10] sm:$0xff]
  %v96 = vld [vmem:[%s1 + $0x18] sm:$0xff]
  %vm97 = vcmask 261120
  %v99 = vsel %vm97, %v29, 0
  %v102 = vsel %vm97, %v30, 0
  %v105 = vsel %vm97, %v31, 0
  %v108 = vsel %vm97, %v32, 0
  %v111 = vsel %vm97, %v33, 0
  %v114 = vsel %vm97, %v34, 0
  %v117 = vsel %vm97, %v35, 0
  %v120 = vsel %vm97, %v36, 0
  %v123 = vsel %vm97, %v37, 0
  %v126 = vsel %vm97, %v38, 0
  %v129 = vsel %vm97, %v39, 0
  %v132 = vsel %vm97, %v40, 0
  %v135 = vsel %vm97, %v41, 0
  %v138 = vsel %vm97, %v42, 0
  %v141 = vsel %vm97, %v43, 0
  %v144 = vsel %vm97, %v44, 0
  %v147 = vsel %vm97, %v45, 0
  %v150 = vsel %vm97, %v46, 0
  %v153 = vsel %vm97, %v47, 0
  %v156 = vsel %vm97, %v48, 0
  %v159 = vsel %vm97, %v49, 0
  %v162 = vsel %vm97, %v50, 0
  %v165 = vsel %vm97, %v51, 0
  %v168 = vsel %vm97, %v52, 0
  %v171 = vsel %vm97, %v53, 0
  %v174 = vsel %vm97, %v54, 0
  %v177 = vsel %vm97, %v55, 0
  %v180 = vsel %vm97, %v56, 0
  %v183 = vsel %vm97, %v57, 0
  %v186 = vsel %vm97, %v58, 0
  %v189 = vsel %vm97, %v59, 0
  %v192 = vsel %vm97, %v60, 0
  %v195 = vsel %vm97, %v61, 0
  %v198 = vsel %vm97, %v62, 0
  %v201 = vsel %vm97, %v63, 0
  %v204 = vsel %vm97, %v64, 0
  %v207 = vsel %vm97, %v65, 0
  %v210 = vsel %vm97, %v66, 0
  %v213 = vsel %vm97, %v67, 0
  %v216 = vsel %vm97, %v68, 0
  %v219 = vsel %vm97, %v69, 0
  %v222 = vsel %vm97, %v70, 0
  %v225 = vsel %vm97, %v71, 0
  %v228 = vsel %vm97, %v72, 0
  %v231 = vsel %vm97, %v73, 0
  %v234 = vsel %vm97, %v74, 0
  %v237 = vsel %vm97, %v75, 0
  %v240 = vsel %vm97, %v76, 0
  %v243 = vsel %vm97, %v77, 0
  %v246 = vsel %vm97, %v78, 0
  %v249 = vsel %vm97, %v79, 0
  %v252 = vsel %vm97, %v80, 0
  %v255 = vsel %vm97, %v81, 0
  %v258 = vsel %vm97, %v82, 0
  %v261 = vsel %vm97, %v83, 0
  %v264 = vsel %vm97, %v84, 0
  %v267 = vsel %vm97, %v85, 0
  %v270 = vsel %vm97, %v86, 0
  %v273 = vsel %vm97, %v87, 0
  %v276 = vsel %vm97, %v88, 0
  %v279 = vsel %vm97, %v89, 0
  %v282 = vsel %vm97, %v90, 0
  %v285 = vsel %vm97, %v91, 0
  %v288 = vsel %vm97, %v92, 0
  %290 = vmatprep.subr.mxu0 0.0
  %291 = vmatpush1.msra.mxu0 %v93
  %292 = vmatprep.subr.mxu0 0.0
  %293 = vmatpush1.msra.mxu0 %v94
  %294 = vmatprep.subr.mxu0 0.0
  %295 = vmatpush1.msra.mxu0 %v95
  %296 = vmatprep.subr.mxu0 0.0
  %297 = vmatpush1.msra.mxu0 %v96
  %298 = vmatprep.subr.mxu0 0.0
  %299 = vmatpush1.msra.mxu0 0.0
  %300 = vmatprep.subr.mxu0 0.0
  %301 = vmatpush1.msra.mxu0 0.0
  %302 = vmatprep.subr.mxu0 0.0
  %303 = vmatpush1.msra.mxu0 0.0
  %304 = vmatprep.subr.mxu0 0.0
  %305 = vmatpush1.msra.mxu0 0.0
  %306 = vmatprep.subr.mxu0 0.0
  %307 = vmatpush1.msra.mxu0 0.0
  %308 = vmatprep.subr.mxu0 0.0
  %309 = vmatpush1.msra.mxu0 0.0
  %310 = vmatprep.subr.mxu0 0.0
  %311 = vmatpush1.msra.mxu0 0.0
  %312 = vmatprep.subr.mxu0 0.0
  %313 = vmatpush1.msra.mxu0 0.0
  %314 = vmatprep.subr.mxu0 0.0
  %315 = vmatpush1.msra.mxu0 0.0
  %316 = vmatprep.subr.mxu0 0.0
  %317 = vmatpush1.msra.mxu0 0.0
  %318 = vmatprep.subr.mxu0 0.0
  %319 = vmatpush1.msra.mxu0 0.0
  %320 = vmatprep.subr.mxu0 0.0
  %321 = vmatpush1.msra.mxu0 0.0
  %322 = vmatprep.subr.mxu0 0.0
  %323 = vmatpush1.msra.mxu0 0.0
  %324 = vmatprep.subr.mxu0 0.0
  %325 = vmatpush1.msra.mxu0 0.0
  %326 = vmatprep.subr.mxu0 0.0
  %327 = vmatpush1.msra.mxu0 0.0
  %328 = vmatprep.subr.mxu0 0.0
  %329 = vmatpush1.msra.mxu0 0.0
  %330 = vmatprep.subr.mxu0 0.0
  %331 = vmatpush1.msra.mxu0 0.0
  %332 = vmatprep.subr.mxu0 0.0
  %333 = vmatpush1.msra.mxu0 0.0
  %334 = vmatprep.subr.mxu0 0.0
  %335 = vmatpush1.msra.mxu0 0.0
  %336 = vmatprep.subr.mxu0 0.0
  %337 = vmatpush1.msra.mxu0 0.0
  %338 = vmatprep.subr.mxu0 0.0
  %339 = vmatpush1.msra.mxu0 0.0
  %340 = vmatprep.subr.mxu0 0.0
  %341 = vmatpush1.msra.mxu0 0.0
  %342 = vmatprep.subr.mxu0 0.0
  %343 = vmatpush1.msra.mxu0 0.0
  %344 = vmatprep.subr.mxu0 0.0
  %345 = vmatpush1.msra.mxu0 0.0
  %346 = vmatprep.subr.mxu0 0.0
  %347 = vmatpush1.msra.mxu0 0.0
  %348 = vmatprep.subr.mxu0 0.0
  %349 = vmatpush1.msra.mxu0 0.0
  %350 = vmatprep.subr.mxu0 0.0
  %351 = vmatpush1.msra.mxu0 0.0
  %352 = vmatprep.subr.mxu0 0.0
  %353 = vmatpush1.msra.mxu0 0.0
  %354 = vmatprep.mubr.f32.mxu0 0.0
  %355 = vmatmul.mubr.f32.gmra.mrb[0].mxu0 %v99
  %v356 = vpop.f32.mrb[0].mxu0
  %v357 = vadd.f32 0.0, %v356
  %v358 = vpop.f32.mrb[0].mxu0
  %359 = vmatprep.mubr.f32.mxu0 0.0
  %360 = vmatmul.mubr.f32.gmra.mrb[0].mxu0 %v102
  %v361 = vpop.f32.mrb[0].mxu0
  %v362 = vadd.f32 0.0, %v361
  %v363 = vpop.f32.mrb[0].mxu0
  %364 = vmatprep.mubr.f32.mxu0 0.0
  %365 = vmatmul.mubr.f32.gmra.mrb[0].mxu0 %v105
  %v366 = vpop.f32.mrb[0].mxu0
  %v367 = vadd.f32 0.0, %v366
  %v368 = vpop.f32.mrb[0].mxu0
  %369 = vmatprep.mubr.f32.mxu0 0.0
  %370 = vmatmul.mubr.f32.gmra.mrb[0].mxu0 %v108
  %v371 = vpop.f32.mrb[0].mxu0
  %v372 = vadd.f32 0.0, %v371
  %v373 = vpop.f32.mrb[0].mxu0
  %374 = vmatprep.mubr.f32.mxu0 0.0
  %375 = vmatmul.mubr.f32.gmra.mrb[0].mxu0 %v111
  %v376 = vpop.f32.mrb[0].mxu0
  %v377 = vadd.f32 0.0, %v376
  %v378 = vpop.f32.mrb[0].mxu0
  %379 = vmatprep.mubr.f32.mxu0 0.0
  %380 = vmatmul.mubr.f32.gmra.mrb[0].mxu0 %v114
  %v381 = vpop.f32.mrb[0].mxu0
  %v382 = vadd.f32 0.0, %v381
  %v383 = vpop.f32.mrb[0].mxu0
  %384 = vmatprep.mubr.f32.mxu0 0.0
  %385 = vmatmul.mubr.f32.gmra.mrb[0].mxu0 %v117
  %v386 = vpop.f32.mrb[0].mxu0
  %v387 = vadd.f32 0.0, %v386
  %v388 = vpop.f32.mrb[0].mxu0
  %389 = vmatprep.mubr.f32.mxu0 0.0
  %390 = vmatmul.mubr.f32.gmra.mrb[0].mxu0 %v120
  %v391 = vpop.f32.mrb[0].mxu0
  %v392 = vadd.f32 0.0, %v391
  %v393 = vpop.f32.mrb[0].mxu0
  %394 = vmatprep.mubr.f32.mxu0 0.0
  %395 = vmatmul.mubr.f32.gmra.mrb[0].mxu0 %v123
  %v396 = vpop.f32.mrb[0].mxu0
  %v397 = vadd.f32 0.0, %v396
  %v398 = vpop.f32.mrb[0].mxu0
  %399 = vmatprep.mubr.f32.mxu0 0.0
  %400 = vmatmul.mubr.f32.gmra.mrb[0].mxu0 %v126
  %v401 = vpop.f32.mrb[0].mxu0
  %v402 = vadd.f32 0.0, %v401
  %v403 = vpop.f32.mrb[0].mxu0
  %404 = vmatprep.mubr.f32.mxu0 0.0
  %405 = vmatmul.mubr.f32.gmra.mrb[0].mxu0 %v129
  %v406 = vpop.f32.mrb[0].mxu0
  %v407 = vadd.f32 0.0, %v406
  %v408 = vpop.f32.mrb[0].mxu0
  %409 = vmatprep.mubr.f32.mxu0 0.0
  %410 = vmatmul.mubr.f32.gmra.mrb[0].mxu0 %v132
  %v411 = vpop.f32.mrb[0].mxu0
  %v412 = vadd.f32 0.0, %v411
  %v413 = vpop.f32.mrb[0].mxu0
  %414 = vmatprep.mubr.f32.mxu0 0.0
  %415 = vmatmul.mubr.f32.gmra.mrb[0].mxu0 %v135
  %v416 = vpop.f32.mrb[0].mxu0
  %v417 = vadd.f32 0.0, %v416
  %v418 = vpop.f32.mrb[0].mxu0
  %419 = vmatprep.mubr.f32.mxu0 0.0
  %420 = vmatmul.mubr.f32.gmra.mrb[0].mxu0 %v138
  %v421 = vpop.f32.mrb[0].mxu0
  %v422 = vadd.f32 0.0, %v421
  %v423 = vpop.f32.mrb[0].mxu0
  %424 = vmatprep.mubr.f32.mxu0 0.0
  %425 = vmatmul.mubr.f32.gmra.mrb[0].mxu0 %v141
  %v426 = vpop.f32.mrb[0].mxu0
  %v427 = vadd.f32 0.0, %v426
  %v428 = vpop.f32.mrb[0].mxu0
  %429 = vmatprep.mubr.f32.mxu0 0.0
  %430 = vmatmul.mubr.f32.gmra.mrb[0].mxu0 %v144
  %v431 = vpop.f32.mrb[0].mxu0
  %v432 = vadd.f32 0.0, %v431
  %v433 = vpop.f32.mrb[0].mxu0
  %434 = vmatprep.mubr.f32.mxu0 0.0
  %435 = vmatmul.mubr.f32.gmra.mrb[0].mxu0 %v147
  %v436 = vpop.f32.mrb[0].mxu0
  %v437 = vadd.f32 0.0, %v436
  %v438 = vpop.f32.mrb[0].mxu0
  %439 = vmatprep.mubr.f32.mxu0 0.0
  %440 = vmatmul.mubr.f32.gmra.mrb[0].mxu0 %v150
  %v441 = vpop.f32.mrb[0].mxu0
  %v442 = vadd.f32 0.0, %v441
  %v443 = vpop.f32.mrb[0].mxu0
  %444 = vmatprep.mubr.f32.mxu0 0.0
  %445 = vmatmul.mubr.f32.gmra.mrb[0].mxu0 %v153
  %v446 = vpop.f32.mrb[0].mxu0
  %v447 = vadd.f32 0.0, %v446
  %v448 = vpop.f32.mrb[0].mxu0
  %449 = vmatprep.mubr.f32.mxu0 0.0
  %450 = vmatmul.mubr.f32.gmra.mrb[0].mxu0 %v156
  %v451 = vpop.f32.mrb[0].mxu0
  %v452 = vadd.f32 0.0, %v451
  %v453 = vpop.f32.mrb[0].mxu0
  %454 = vmatprep.mubr.f32.mxu0 0.0
  %455 = vmatmul.mubr.f32.gmra.mrb[0].mxu0 %v159
  %v456 = vpop.f32.mrb[0].mxu0
  %v457 = vadd.f32 0.0, %v456
  %v458 = vpop.f32.mrb[0].mxu0
  %459 = vmatprep.mubr.f32.mxu0 0.0
  %460 = vmatmul.mubr.f32.gmra.mrb[0].mxu0 %v162
  %v461 = vpop.f32.mrb[0].mxu0
  %v462 = vadd.f32 0.0, %v461
  %v463 = vpop.f32.mrb[0].mxu0
  %464 = vmatprep.mubr.f32.mxu0 0.0
  %465 = vmatmul.mubr.f32.gmra.mrb[0].mxu0 %v165
  %v466 = vpop.f32.mrb[0].mxu0
  %v467 = vadd.f32 0.0, %v466
  %v468 = vpop.f32.mrb[0].mxu0
  %469 = vmatprep.mubr.f32.mxu0 0.0
  %470 = vmatmul.mubr.f32.gmra.mrb[0].mxu0 %v168
  %v471 = vpop.f32.mrb[0].mxu0
  %v472 = vadd.f32 0.0, %v471
  %v473 = vpop.f32.mrb[0].mxu0
  %474 = vmatprep.mubr.f32.mxu0 0.0
  %475 = vmatmul.mubr.f32.gmra.mrb[0].mxu0 %v171
  %v476 = vpop.f32.mrb[0].mxu0
  %v477 = vadd.f32 0.0, %v476
  %v478 = vpop.f32.mrb[0].mxu0
  %479 = vmatprep.mubr.f32.mxu0 0.0
  %480 = vmatmul.mubr.f32.gmra.mrb[0].mxu0 %v174
  %v481 = vpop.f32.mrb[0].mxu0
  %v482 = vadd.f32 0.0, %v481
  %v483 = vpop.f32.mrb[0].mxu0
  %484 = vmatprep.mubr.f32.mxu0 0.0
  %485 = vmatmul.mubr.f32.gmra.mrb[0].mxu0 %v177
  %v486 = vpop.f32.mrb[0].mxu0
  %v487 = vadd.f32 0.0, %v486
  %v488 = vpop.f32.mrb[0].mxu0
  %489 = vmatprep.mubr.f32.mxu0 0.0
  %490 = vmatmul.mubr.f32.gmra.mrb[0].mxu0 %v180
  %v491 = vpop.f32.mrb[0].mxu0
  %v492 = vadd.f32 0.0, %v491
  %v493 = vpop.f32.mrb[0].mxu0
  %494 = vmatprep.mubr.f32.mxu0 0.0
  %495 = vmatmul.mubr.f32.gmra.mrb[0].mxu0 %v183
  %v496 = vpop.f32.mrb[0].mxu0
  %v497 = vadd.f32 0.0, %v496
  %v498 = vpop.f32.mrb[0].mxu0
  %499 = vmatprep.mubr.f32.mxu0 0.0
  %500 = vmatmul.mubr.f32.gmra.mrb[0].mxu0 %v186
  %v501 = vpop.f32.mrb[0].mxu0
  %v502 = vadd.f32 0.0, %v501
  %v503 = vpop.f32.mrb[0].mxu0
  %504 = vmatprep.mubr.f32.mxu0 0.0
  %505 = vmatmul.mubr.f32.gmra.mrb[0].mxu0 %v189
  %v506 = vpop.f32.mrb[0].mxu0
  %v507 = vadd.f32 0.0, %v506
  %v508 = vpop.f32.mrb[0].mxu0
  %509 = vmatprep.mubr.f32.mxu0 0.0
  %510 = vmatmul.mubr.f32.gmra.mrb[0].mxu0 %v192
  %v511 = vpop.f32.mrb[0].mxu0
  %v512 = vadd.f32 0.0, %v511
  %v513 = vpop.f32.mrb[0].mxu0
  %514 = vmatprep.mubr.f32.mxu0 0.0
  %515 = vmatmul.mubr.f32.gmra.mrb[0].mxu0 %v195
  %v516 = vpop.f32.mrb[0].mxu0
  %v517 = vadd.f32 0.0, %v516
  %v518 = vpop.f32.mrb[0].mxu0
  %519 = vmatprep.mubr.f32.mxu0 0.0
  %520 = vmatmul.mubr.f32.gmra.mrb[0].mxu0 %v198
  %v521 = vpop.f32.mrb[0].mxu0
  %v522 = vadd.f32 0.0, %v521
  %v523 = vpop.f32.mrb[0].mxu0
  %524 = vmatprep.mubr.f32.mxu0 0.0
  %525 = vmatmul.mubr.f32.gmra.mrb[0].mxu0 %v201
  %v526 = vpop.f32.mrb[0].mxu0
  %v527 = vadd.f32 0.0, %v526
  %v528 = vpop.f32.mrb[0].mxu0
  %529 = vmatprep.mubr.f32.mxu0 0.0
  %530 = vmatmul.mubr.f32.gmra.mrb[0].mxu0 %v204
  %v531 = vpop.f32.mrb[0].mxu0
  %v532 = vadd.f32 0.0, %v531
  %v533 = vpop.f32.mrb[0].mxu0
  %534 = vmatprep.mubr.f32.mxu0 0.0
  %535 = vmatmul.mubr.f32.gmra.mrb[0].mxu0 %v207
  %v536 = vpop.f32.mrb[0].mxu0
  %v537 = vadd.f32 0.0, %v536
  %v538 = vpop.f32.mrb[0].mxu0
  %539 = vmatprep.mubr.f32.mxu0 0.0
  %540 = vmatmul.mubr.f32.gmra.mrb[0].mxu0 %v210
  %v541 = vpop.f32.mrb[0].mxu0
  %v542 = vadd.f32 0.0, %v541
  %v543 = vpop.f32.mrb[0].mxu0
  %544 = vmatprep.mubr.f32.mxu0 0.0
  %545 = vmatmul.mubr.f32.gmra.mrb[0].mxu0 %v213
  %v546 = vpop.f32.mrb[0].mxu0
  %v547 = vadd.f32 0.0, %v546
  %v548 = vpop.f32.mrb[0].mxu0
  %549 = vmatprep.mubr.f32.mxu0 0.0
  %550 = vmatmul.mubr.f32.gmra.mrb[0].mxu0 %v216
  %v551 = vpop.f32.mrb[0].mxu0
  %v552 = vadd.f32 0.0, %v551
  %v553 = vpop.f32.mrb[0].mxu0
  %554 = vmatprep.mubr.f32.mxu0 0.0
  %555 = vmatmul.mubr.f32.gmra.mrb[0].mxu0 %v219
  %v556 = vpop.f32.mrb[0].mxu0
  %v557 = vadd.f32 0.0, %v556
  %v558 = vpop.f32.mrb[0].mxu0
  %559 = vmatprep.mubr.f32.mxu0 0.0
  %560 = vmatmul.mubr.f32.gmra.mrb[0].mxu0 %v222
  %v561 = vpop.f32.mrb[0].mxu0
  %v562 = vadd.f32 0.0, %v561
  %v563 = vpop.f32.mrb[0].mxu0
  %564 = vmatprep.mubr.f32.mxu0 0.0
  %565 = vmatmul.mubr.f32.gmra.mrb[0].mxu0 %v225
  %v566 = vpop.f32.mrb[0].mxu0
  %v567 = vadd.f32 0.0, %v566
  %v568 = vpop.f32.mrb[0].mxu0
  %569 = vmatprep.mubr.f32.mxu0 0.0
  %570 = vmatmul.mubr.f32.gmra.mrb[0].mxu0 %v228
  %v571 = vpop.f32.mrb[0].mxu0
  %v572 = vadd.f32 0.0, %v571
  %v573 = vpop.f32.mrb[0].mxu0
  %574 = vmatprep.mubr.f32.mxu0 0.0
  %575 = vmatmul.mubr.f32.gmra.mrb[0].mxu0 %v231
  %v576 = vpop.f32.mrb[0].mxu0
  %v577 = vadd.f32 0.0, %v576
  %v578 = vpop.f32.mrb[0].mxu0
  %579 = vmatprep.mubr.f32.mxu0 0.0
  %580 = vmatmul.mubr.f32.gmra.mrb[0].mxu0 %v234
  %v581 = vpop.f32.mrb[0].mxu0
  %v582 = vadd.f32 0.0, %v581
  %v583 = vpop.f32.mrb[0].mxu0
  %584 = vmatprep.mubr.f32.mxu0 0.0
  %585 = vmatmul.mubr.f32.gmra.mrb[0].mxu0 %v237
  %v586 = vpop.f32.mrb[0].mxu0
  %v587 = vadd.f32 0.0, %v586
  %v588 = vpop.f32.mrb[0].mxu0
  %589 = vmatprep.mubr.f32.mxu0 0.0
  %590 = vmatmul.mubr.f32.gmra.mrb[0].mxu0 %v240
  %v591 = vpop.f32.mrb[0].mxu0
  %v592 = vadd.f32 0.0, %v591
  %v593 = vpop.f32.mrb[0].mxu0
  %594 = vmatprep.mubr.f32.mxu0 0.0
  %595 = vmatmul.mubr.f32.gmra.mrb[0].mxu0 %v243
  %v596 = vpop.f32.mrb[0].mxu0
  %v597 = vadd.f32 0.0, %v596
  %v598 = vpop.f32.mrb[0].mxu0
  %599 = vmatprep.mubr.f32.mxu0 0.0
  %600 = vmatmul.mubr.f32.gmra.mrb[0].mxu0 %v246
  %v601 = vpop.f32.mrb[0].mxu0
  %v602 = vadd.f32 0.0, %v601
  %v603 = vpop.f32.mrb[0].mxu0
  %604 = vmatprep.mubr.f32.mxu0 0.0
  %605 = vmatmul.mubr.f32.gmra.mrb[0].mxu0 %v249
  %v606 = vpop.f32.mrb[0].mxu0
  %v607 = vadd.f32 0.0, %v606
  %v608 = vpop.f32.mrb[0].mxu0
  %609 = vmatprep.mubr.f32.mxu0 0.0
  %610 = vmatmul.mubr.f32.gmra.mrb[0].mxu0 %v252
  %v611 = vpop.f32.mrb[0].mxu0
  %v612 = vadd.f32 0.0, %v611
  %v613 = vpop.f32.mrb[0].mxu0
  %614 = vmatprep.mubr.f32.mxu0 0.0
  %615 = vmatmul.mubr.f32.gmra.mrb[0].mxu0 %v255
  %v616 = vpop.f32.mrb[0].mxu0
  %v617 = vadd.f32 0.0, %v616
  %v618 = vpop.f32.mrb[0].mxu0
  %619 = vmatprep.mubr.f32.mxu0 0.0
  %620 = vmatmul.mubr.f32.gmra.mrb[0].mxu0 %v258
  %v621 = vpop.f32.mrb[0].mxu0
  %v622 = vadd.f32 0.0, %v621
  %v623 = vpop.f32.mrb[0].mxu0
  %624 = vmatprep.mubr.f32.mxu0 0.0
  %625 = vmatmul.mubr.f32.gmra.mrb[0].mxu0 %v261
  %v626 = vpop.f32.mrb[0].mxu0
  %v627 = vadd.f32 0.0, %v626
  %v628 = vpop.f32.mrb[0].mxu0
  %629 = vmatprep.mubr.f32.mxu0 0.0
  %630 = vmatmul.mubr.f32.gmra.mrb[0].mxu0 %v264
  %v631 = vpop.f32.mrb[0].mxu0
  %v632 = vadd.f32 0.0, %v631
  %v633 = vpop.f32.mrb[0].mxu0
  %634 = vmatprep.mubr.f32.mxu0 0.0
  %635 = vmatmul.mubr.f32.gmra.mrb[0].mxu0 %v267
  %v636 = vpop.f32.mrb[0].mxu0
  %v637 = vadd.f32 0.0, %v636
  %v638 = vpop.f32.mrb[0].mxu0
  %639 = vmatprep.mubr.f32.mxu0 0.0
  %640 = vmatmul.mubr.f32.gmra.mrb[0].mxu0 %v270
  %v641 = vpop.f32.mrb[0].mxu0
  %v642 = vadd.f32 0.0, %v641
  %v643 = vpop.f32.mrb[0].mxu0
  %644 = vmatprep.mubr.f32.mxu0 0.0
  %645 = vmatmul.mubr.f32.gmra.mrb[0].mxu0 %v273
  %v646 = vpop.f32.mrb[0].mxu0
  %v647 = vadd.f32 0.0, %v646
  %v648 = vpop.f32.mrb[0].mxu0
  %649 = vmatprep.mubr.f32.mxu0 0.0
  %650 = vmatmul.mubr.f32.gmra.mrb[0].mxu0 %v276
  %v651 = vpop.f32.mrb[0].mxu0
  %v652 = vadd.f32 0.0, %v651
  %v653 = vpop.f32.mrb[0].mxu0
  %654 = vmatprep.mubr.f32.mxu0 0.0
  %655 = vmatmul.mubr.f32.gmra.mrb[0].mxu0 %v279
  %v656 = vpop.f32.mrb[0].mxu0
  %v657 = vadd.f32 0.0, %v656
  %v658 = vpop.f32.mrb[0].mxu0
  %659 = vmatprep.mubr.f32.mxu0 0.0
  %660 = vmatmul.mubr.f32.gmra.mrb[0].mxu0 %v282
  %v661 = vpop.f32.mrb[0].mxu0
  %v662 = vadd.f32 0.0, %v661
  %v663 = vpop.f32.mrb[0].mxu0
  %664 = vmatprep.mubr.f32.mxu0 0.0
  %665 = vmatmul.mubr.f32.gmra.mrb[0].mxu0 %v285
  %v666 = vpop.f32.mrb[0].mxu0
  %v667 = vadd.f32 0.0, %v666
  %v668 = vpop.f32.mrb[0].mxu0
  %669 = vmatprep.mubr.f32.mxu0 0.0
  %670 = vmatmul.mubr.f32.gmra.mrb[0].mxu0 %v288
  %v671 = vpop.f32.mrb[0].mxu0
  %v672 = vadd.f32 0.0, %v671
  %v673 = vpop.f32.mrb[0].mxu0
  %674 = vdwg.mxu0
  %v675 = vld [vmem:[%s2] sm:$0x1]
  %v677 = vlaneseq
  %v678 = vshrl.u32 %v677, 7
  %v679 = vsub.s32 0, %v678
  %v680 = vrot.slane %v675, %v679
  %v682 = vmul.f32 %v357, %v680
  %v683 = vmul.f32 %v362, %v680
  %v684 = vmul.f32 %v367, %v680
  %v685 = vmul.f32 %v372, %v680
  %v686 = vmul.f32 %v377, %v680
  %v687 = vmul.f32 %v382, %v680
  %v688 = vmul.f32 %v387, %v680
  %v689 = vmul.f32 %v392, %v680
  %v690 = vmul.f32 %v397, %v680
  %v691 = vmul.f32 %v402, %v680
  %v692 = vmul.f32 %v407, %v680
  %v693 = vmul.f32 %v412, %v680
  %v694 = vmul.f32 %v417, %v680
  %v695 = vmul.f32 %v422, %v680
  %v696 = vmul.f32 %v427, %v680
  %v697 = vmul.f32 %v432, %v680
  %v698 = vmul.f32 %v437, %v680
  %v699 = vmul.f32 %v442, %v680
  %v700 = vmul.f32 %v447, %v680
  %v701 = vmul.f32 %v452, %v680
  %v702 = vmul.f32 %v457, %v680
  %v703 = vmul.f32 %v462, %v680
  %v704 = vmul.f32 %v467, %v680
  %v705 = vmul.f32 %v472, %v680
  %v706 = vmul.f32 %v477, %v680
  %v707 = vmul.f32 %v482, %v680
  %v708 = vmul.f32 %v487, %v680
  %v709 = vmul.f32 %v492, %v680
  %v710 = vmul.f32 %v497, %v680
  %v711 = vmul.f32 %v502, %v680
  %v712 = vmul.f32 %v507, %v680
  %v713 = vmul.f32 %v512, %v680
  %v714 = vmul.f32 %v517, %v680
  %v715 = vmul.f32 %v522, %v680
  %v716 = vmul.f32 %v527, %v680
  %v717 = vmul.f32 %v532, %v680
  %v718 = vmul.f32 %v537, %v680
  %v719 = vmul.f32 %v542, %v680
  %v720 = vmul.f32 %v547, %v680
  %v721 = vmul.f32 %v552, %v680
  %v722 = vmul.f32 %v557, %v680
  %v723 = vmul.f32 %v562, %v680
  %v724 = vmul.f32 %v567, %v680
  %v725 = vmul.f32 %v572, %v680
  %v726 = vmul.f32 %v577, %v680
  %v727 = vmul.f32 %v582, %v680
  %v728 = vmul.f32 %v587, %v680
  %v729 = vmul.f32 %v592, %v680
  %v730 = vmul.f32 %v597, %v680
  %v731 = vmul.f32 %v602, %v680
  %v732 = vmul.f32 %v607, %v680
  %v733 = vmul.f32 %v612, %v680
  %v734 = vmul.f32 %v617, %v680
  %v735 = vmul.f32 %v622, %v680
  %v736 = vmul.f32 %v627, %v680
  %v737 = vmul.f32 %v632, %v680
  %v738 = vmul.f32 %v637, %v680
  %v739 = vmul.f32 %v642, %v680
  %v740 = vmul.f32 %v647, %v680
  %v741 = vmul.f32 %v652, %v680
  %v742 = vmul.f32 %v657, %v680
  %v743 = vmul.f32 %v662, %v680
  %v744 = vmul.f32 %v667, %v680
  %v745 = vmul.f32 %v672, %v680
  %v746 = vld [vmem:[%s3] sm:$0x1]
  %v748 = vlaneseq
  %v749 = vshrl.u32 %v748, 7
  %v750 = vsub.s32 0, %v749
  %v751 = vrot.slane %v746, %v750
  %v753 = vadd.f32 %v682, %v751
  %v754 = vadd.f32 %v683, %v751
  %v755 = vadd.f32 %v684, %v751
  %v756 = vadd.f32 %v685, %v751
  %v757 = vadd.f32 %v686, %v751
  %v758 = vadd.f32 %v687, %v751
  %v759 = vadd.f32 %v688, %v751
  %v760 = vadd.f32 %v689, %v751
  %v761 = vadd.f32 %v690, %v751
  %v762 = vadd.f32 %v691, %v751
  %v763 = vadd.f32 %v692, %v751
  %v764 = vadd.f32 %v693, %v751
  %v765 = vadd.f32 %v694, %v751
  %v766 = vadd.f32 %v695, %v751
  %v767 = vadd.f32 %v696, %v751
  %v768 = vadd.f32 %v697, %v751
  %v769 = vadd.f32 %v698, %v751
  %v770 = vadd.f32 %v699, %v751
  %v771 = vadd.f32 %v700, %v751
  %v772 = vadd.f32 %v701, %v751
  %v773 = vadd.f32 %v702, %v751
  %v774 = vadd.f32 %v703, %v751
  %v775 = vadd.f32 %v704, %v751
  %v776 = vadd.f32 %v705, %v751
  %v777 = vadd.f32 %v706, %v751
  %v778 = vadd.f32 %v707, %v751
  %v779 = vadd.f32 %v708, %v751
  %v780 = vadd.f32 %v709, %v751
  %v781 = vadd.f32 %v710, %v751
  %v782 = vadd.f32 %v711, %v751
  %v783 = vadd.f32 %v712, %v751
  %v784 = vadd.f32 %v713, %v751
  %v785 = vadd.f32 %v714, %v751
  %v786 = vadd.f32 %v715, %v751
  %v787 = vadd.f32 %v716, %v751
  %v788 = vadd.f32 %v717, %v751
  %v789 = vadd.f32 %v718, %v751
  %v790 = vadd.f32 %v719, %v751
  %v791 = vadd.f32 %v720, %v751
  %v792 = vadd.f32 %v721, %v751
  %v793 = vadd.f32 %v722, %v751
  %v794 = vadd.f32 %v723, %v751
  %v795 = vadd.f32 %v724, %v751
  %v796 = vadd.f32 %v725, %v751
  %v797 = vadd.f32 %v726, %v751
  %v798 = vadd.f32 %v727, %v751
  %v799 = vadd.f32 %v728, %v751
  %v800 = vadd.f32 %v729, %v751
  %v801 = vadd.f32 %v730, %v751
  %v802 = vadd.f32 %v731, %v751
  %v803 = vadd.f32 %v732, %v751
  %v804 = vadd.f32 %v733, %v751
  %v805 = vadd.f32 %v734, %v751
  %v806 = vadd.f32 %v735, %v751
  %v807 = vadd.f32 %v736, %v751
  %v808 = vadd.f32 %v737, %v751
  %v809 = vadd.f32 %v738, %v751
  %v810 = vadd.f32 %v739, %v751
  %v811 = vadd.f32 %v740, %v751
  %v812 = vadd.f32 %v741, %v751
  %v813 = vadd.f32 %v742, %v751
  %v814 = vadd.f32 %v743, %v751
  %v815 = vadd.f32 %v744, %v751
  %v816 = vadd.f32 %v745, %v751
  %v817 = vxor.u32 %v753, 2147483648
  %v818 = vxor.u32 %v754, 2147483648
  %v819 = vxor.u32 %v755, 2147483648
  %v820 = vxor.u32 %v756, 2147483648
  %v821 = vxor.u32 %v757, 2147483648
  %v822 = vxor.u32 %v758, 2147483648
  %v823 = vxor.u32 %v759, 2147483648
  %v824 = vxor.u32 %v760, 2147483648
  %v825 = vxor.u32 %v761, 2147483648
  %v826 = vxor.u32 %v762, 2147483648
  %v827 = vxor.u32 %v763, 2147483648
  %v828 = vxor.u32 %v764, 2147483648
  %v829 = vxor.u32 %v765, 2147483648
  %v830 = vxor.u32 %v766, 2147483648
  %v831 = vxor.u32 %v767, 2147483648
  %v832 = vxor.u32 %v768, 2147483648
  %v833 = vxor.u32 %v769, 2147483648
  %v834 = vxor.u32 %v770, 2147483648
  %v835 = vxor.u32 %v771, 2147483648
  %v836 = vxor.u32 %v772, 2147483648
  %v837 = vxor.u32 %v773, 2147483648
  %v838 = vxor.u32 %v774, 2147483648
  %v839 = vxor.u32 %v775, 2147483648
  %v840 = vxor.u32 %v776, 2147483648
  %v841 = vxor.u32 %v777, 2147483648
  %v842 = vxor.u32 %v778, 2147483648
  %v843 = vxor.u32 %v779, 2147483648
  %v844 = vxor.u32 %v780, 2147483648
  %v845 = vxor.u32 %v781, 2147483648
  %v846 = vxor.u32 %v782, 2147483648
  %v847 = vxor.u32 %v783, 2147483648
  %v848 = vxor.u32 %v784, 2147483648
  %v849 = vxor.u32 %v785, 2147483648
  %v850 = vxor.u32 %v786, 2147483648
  %v851 = vxor.u32 %v787, 2147483648
  %v852 = vxor.u32 %v788, 2147483648
  %v853 = vxor.u32 %v789, 2147483648
  %v854 = vxor.u32 %v790, 2147483648
  %v855 = vxor.u32 %v791, 2147483648
  %v856 = vxor.u32 %v792, 2147483648
  %v857 = vxor.u32 %v793, 2147483648
  %v858 = vxor.u32 %v794, 2147483648
  %v859 = vxor.u32 %v795, 2147483648
  %v860 = vxor.u32 %v796, 2147483648
  %v861 = vxor.u32 %v797, 2147483648
  %v862 = vxor.u32 %v798, 2147483648
  %v863 = vxor.u32 %v799, 2147483648
  %v864 = vxor.u32 %v800, 2147483648
  %v865 = vxor.u32 %v801, 2147483648
  %v866 = vxor.u32 %v802, 2147483648
  %v867 = vxor.u32 %v803, 2147483648
  %v868 = vxor.u32 %v804, 2147483648
  %v869 = vxor.u32 %v805, 2147483648
  %v870 = vxor.u32 %v806, 2147483648
  %v871 = vxor.u32 %v807, 2147483648
  %v872 = vxor.u32 %v808, 2147483648
  %v873 = vxor.u32 %v809, 2147483648
  %v874 = vxor.u32 %v810, 2147483648
  %v875 = vxor.u32 %v811, 2147483648
  %v876 = vxor.u32 %v812, 2147483648
  %v877 = vxor.u32 %v813, 2147483648
  %v878 = vxor.u32 %v814, 2147483648
  %v879 = vxor.u32 %v815, 2147483648
  %v880 = vxor.u32 %v816, 2147483648
  %v881 = vmul.f32 %v817, 1.442695
  %v882 = vpow.pop %v881
  %v883 = vmul.f32 %v818, 1.442695
  %v884 = vpow.pop %v883
  %v885 = vmul.f32 %v819, 1.442695
  %v886 = vpow.pop %v885
  %v887 = vmul.f32 %v820, 1.442695
  %v888 = vpow.pop %v887
  %v889 = vmul.f32 %v821, 1.442695
  %v890 = vpow.pop %v889
  %v891 = vmul.f32 %v822, 1.442695
  %v892 = vpow.pop %v891
  %v893 = vmul.f32 %v823, 1.442695
  %v894 = vpow.pop %v893
  %v895 = vmul.f32 %v824, 1.442695
  %v896 = vpow.pop %v895
  %v897 = vmul.f32 %v825, 1.442695
  %v898 = vpow.pop %v897
  %v899 = vmul.f32 %v826, 1.442695
  %v900 = vpow.pop %v899
  %v901 = vmul.f32 %v827, 1.442695
  %v902 = vpow.pop %v901
  %v903 = vmul.f32 %v828, 1.442695
  %v904 = vpow.pop %v903
  %v905 = vmul.f32 %v829, 1.442695
  %v906 = vpow.pop %v905
  %v907 = vmul.f32 %v830, 1.442695
  %v908 = vpow.pop %v907
  %v909 = vmul.f32 %v831, 1.442695
  %v910 = vpow.pop %v909
  %v911 = vmul.f32 %v832, 1.442695
  %v912 = vpow.pop %v911
  %v913 = vmul.f32 %v833, 1.442695
  %v914 = vpow.pop %v913
  %v915 = vmul.f32 %v834, 1.442695
  %v916 = vpow.pop %v915
  %v917 = vmul.f32 %v835, 1.442695
  %v918 = vpow.pop %v917
  %v919 = vmul.f32 %v836, 1.442695
  %v920 = vpow.pop %v919
  %v921 = vmul.f32 %v837, 1.442695
  %v922 = vpow.pop %v921
  %v923 = vmul.f32 %v838, 1.442695
  %v924 = vpow.pop %v923
  %v925 = vmul.f32 %v839, 1.442695
  %v926 = vpow.pop %v925
  %v927 = vmul.f32 %v840, 1.442695
  %v928 = vpow.pop %v927
  %v929 = vmul.f32 %v841, 1.442695
  %v930 = vpow.pop %v929
  %v931 = vmul.f32 %v842, 1.442695
  %v932 = vpow.pop %v931
  %v933 = vmul.f32 %v843, 1.442695
  %v934 = vpow.pop %v933
  %v935 = vmul.f32 %v844, 1.442695
  %v936 = vpow.pop %v935
  %v937 = vmul.f32 %v845, 1.442695
  %v938 = vpow.pop %v937
  %v939 = vmul.f32 %v846, 1.442695
  %v940 = vpow.pop %v939
  %v941 = vmul.f32 %v847, 1.442695
  %v942 = vpow.pop %v941
  %v943 = vmul.f32 %v848, 1.442695
  %v944 = vpow.pop %v943
  %v945 = vmul.f32 %v849, 1.442695
  %v946 = vpow.pop %v945
  %v947 = vmul.f32 %v850, 1.442695
  %v948 = vpow.pop %v947
  %v949 = vmul.f32 %v851, 1.442695
  %v950 = vpow.pop %v949
  %v951 = vmul.f32 %v852, 1.442695
  %v952 = vpow.pop %v951
  %v953 = vmul.f32 %v853, 1.442695
  %v954 = vpow.pop %v953
  %v955 = vmul.f32 %v854, 1.442695
  %v956 = vpow.pop %v955
  %v957 = vmul.f32 %v855, 1.442695
  %v958 = vpow.pop %v957
  %v959 = vmul.f32 %v856, 1.442695
  %v960 = vpow.pop %v959
  %v961 = vmul.f32 %v857, 1.442695
  %v962 = vpow.pop %v961
  %v963 = vmul.f32 %v858, 1.442695
  %v964 = vpow.pop %v963
  %v965 = vmul.f32 %v859, 1.442695
  %v966 = vpow.pop %v965
  %v967 = vmul.f32 %v860, 1.442695
  %v968 = vpow.pop %v967
  %v969 = vmul.f32 %v861, 1.442695
  %v970 = vpow.pop %v969
  %v971 = vmul.f32 %v862, 1.442695
  %v972 = vpow.pop %v971
  %v973 = vmul.f32 %v863, 1.442695
  %v974 = vpow.pop %v973
  %v975 = vmul.f32 %v864, 1.442695
  %v976 = vpow.pop %v975
  %v977 = vmul.f32 %v865, 1.442695
  %v978 = vpow.pop %v977
  %v979 = vmul.f32 %v866, 1.442695
  %v980 = vpow.pop %v979
  %v981 = vmul.f32 %v867, 1.442695
  %v982 = vpow.pop %v981
  %v983 = vmul.f32 %v868, 1.442695
  %v984 = vpow.pop %v983
  %v985 = vmul.f32 %v869, 1.442695
  %v986 = vpow.pop %v985
  %v987 = vmul.f32 %v870, 1.442695
  %v988 = vpow.pop %v987
  %v989 = vmul.f32 %v871, 1.442695
  %v990 = vpow.pop %v989
  %v991 = vmul.f32 %v872, 1.442695
  %v992 = vpow.pop %v991
  %v993 = vmul.f32 %v873, 1.442695
  %v994 = vpow.pop %v993
  %v995 = vmul.f32 %v874, 1.442695
  %v996 = vpow.pop %v995
  %v997 = vmul.f32 %v875, 1.442695
  %v998 = vpow.pop %v997
  %v999 = vmul.f32 %v876, 1.442695
  %v1000 = vpow.pop %v999
  %v1001 = vmul.f32 %v877, 1.442695
  %v1002 = vpow.pop %v1001
  %v1003 = vmul.f32 %v878, 1.442695
  %v1004 = vpow.pop %v1003
  %v1005 = vmul.f32 %v879, 1.442695
  %v1006 = vpow.pop %v1005
  %v1007 = vmul.f32 %v880, 1.442695
  %v1008 = vpow.pop %v1007
  %v1009 = vadd.f32 %v882, 1.0
  %v1010 = vadd.f32 %v884, 1.0
  %v1011 = vadd.f32 %v886, 1.0
  %v1012 = vadd.f32 %v888, 1.0
  %v1013 = vadd.f32 %v890, 1.0
  %v1014 = vadd.f32 %v892, 1.0
  %v1015 = vadd.f32 %v894, 1.0
  %v1016 = vadd.f32 %v896, 1.0
  %v1017 = vadd.f32 %v898, 1.0
  %v1018 = vadd.f32 %v900, 1.0
  %v1019 = vadd.f32 %v902, 1.0
  %v1020 = vadd.f32 %v904, 1.0
  %v1021 = vadd.f32 %v906, 1.0
  %v1022 = vadd.f32 %v908, 1.0
  %v1023 = vadd.f32 %v910, 1.0
  %v1024 = vadd.f32 %v912, 1.0
  %v1025 = vadd.f32 %v914, 1.0
  %v1026 = vadd.f32 %v916, 1.0
  %v1027 = vadd.f32 %v918, 1.0
  %v1028 = vadd.f32 %v920, 1.0
  %v1029 = vadd.f32 %v922, 1.0
  %v1030 = vadd.f32 %v924, 1.0
  %v1031 = vadd.f32 %v926, 1.0
  %v1032 = vadd.f32 %v928, 1.0
  %v1033 = vadd.f32 %v930, 1.0
  %v1034 = vadd.f32 %v932, 1.0
  %v1035 = vadd.f32 %v934, 1.0
  %v1036 = vadd.f32 %v936, 1.0
  %v1037 = vadd.f32 %v938, 1.0
  %v1038 = vadd.f32 %v940, 1.0
  %v1039 = vadd.f32 %v942, 1.0
  %v1040 = vadd.f32 %v944, 1.0
  %v1041 = vadd.f32 %v946, 1.0
  %v1042 = vadd.f32 %v948, 1.0
  %v1043 = vadd.f32 %v950, 1.0
  %v1044 = vadd.f32 %v952, 1.0
  %v1045 = vadd.f32 %v954, 1.0
  %v1046 = vadd.f32 %v956, 1.0
  %v1047 = vadd.f32 %v958, 1.0
  %v1048 = vadd.f32 %v960, 1.0
  %v1049 = vadd.f32 %v962, 1.0
  %v1050 = vadd.f32 %v964, 1.0
  %v1051 = vadd.f32 %v966, 1.0
  %v1052 = vadd.f32 %v968, 1.0
  %v1053 = vadd.f32 %v970, 1.0
  %v1054 = vadd.f32 %v972, 1.0
  %v1055 = vadd.f32 %v974, 1.0
  %v1056 = vadd.f32 %v976, 1.0
  %v1057 = vadd.f32 %v978, 1.0
  %v1058 = vadd.f32 %v980, 1.0
  %v1059 = vadd.f32 %v982, 1.0
  %v1060 = vadd.f32 %v984, 1.0
  %v1061 = vadd.f32 %v986, 1.0
  %v1062 = vadd.f32 %v988, 1.0
  %v1063 = vadd.f32 %v990, 1.0
  %v1064 = vadd.f32 %v992, 1.0
  %v1065 = vadd.f32 %v994, 1.0
  %v1066 = vadd.f32 %v996, 1.0
  %v1067 = vadd.f32 %v998, 1.0
  %v1068 = vadd.f32 %v1000, 1.0
  %v1069 = vadd.f32 %v1002, 1.0
  %v1070 = vadd.f32 %v1004, 1.0
  %v1071 = vadd.f32 %v1006, 1.0
  %v1072 = vadd.f32 %v1008, 1.0
  %v1073 = vrcp.pop %v1009
  %v1074 = vmul.f32 1.0, %v1073
  %v1075 = vrcp.pop %v1010
  %v1076 = vmul.f32 1.0, %v1075
  %v1077 = vrcp.pop %v1011
  %v1078 = vmul.f32 1.0, %v1077
  %v1079 = vrcp.pop %v1012
  %v1080 = vmul.f32 1.0, %v1079
  %v1081 = vrcp.pop %v1013
  %v1082 = vmul.f32 1.0, %v1081
  %v1083 = vrcp.pop %v1014
  %v1084 = vmul.f32 1.0, %v1083
  %v1085 = vrcp.pop %v1015
  %v1086 = vmul.f32 1.0, %v1085
  %v1087 = vrcp.pop %v1016
  %v1088 = vmul.f32 1.0, %v1087
  %v1089 = vrcp.pop %v1017
  %v1090 = vmul.f32 1.0, %v1089
  %v1091 = vrcp.pop %v1018
  %v1092 = vmul.f32 1.0, %v1091
  %v1093 = vrcp.pop %v1019
  %v1094 = vmul.f32 1.0, %v1093
  %v1095 = vrcp.pop %v1020
  %v1096 = vmul.f32 1.0, %v1095
  %v1097 = vrcp.pop %v1021
  %v1098 = vmul.f32 1.0, %v1097
  %v1099 = vrcp.pop %v1022
  %v1100 = vmul.f32 1.0, %v1099
  %v1101 = vrcp.pop %v1023
  %v1102 = vmul.f32 1.0, %v1101
  %v1103 = vrcp.pop %v1024
  %v1104 = vmul.f32 1.0, %v1103
  %v1105 = vrcp.pop %v1025
  %v1106 = vmul.f32 1.0, %v1105
  %v1107 = vrcp.pop %v1026
  %v1108 = vmul.f32 1.0, %v1107
  %v1109 = vrcp.pop %v1027
  %v1110 = vmul.f32 1.0, %v1109
  %v1111 = vrcp.pop %v1028
  %v1112 = vmul.f32 1.0, %v1111
  %v1113 = vrcp.pop %v1029
  %v1114 = vmul.f32 1.0, %v1113
  %v1115 = vrcp.pop %v1030
  %v1116 = vmul.f32 1.0, %v1115
  %v1117 = vrcp.pop %v1031
  %v1118 = vmul.f32 1.0, %v1117
  %v1119 = vrcp.pop %v1032
  %v1120 = vmul.f32 1.0, %v1119
  %v1121 = vrcp.pop %v1033
  %v1122 = vmul.f32 1.0, %v1121
  %v1123 = vrcp.pop %v1034
  %v1124 = vmul.f32 1.0, %v1123
  %v1125 = vrcp.pop %v1035
  %v1126 = vmul.f32 1.0, %v1125
  %v1127 = vrcp.pop %v1036
  %v1128 = vmul.f32 1.0, %v1127
  %v1129 = vrcp.pop %v1037
  %v1130 = vmul.f32 1.0, %v1129
  %v1131 = vrcp.pop %v1038
  %v1132 = vmul.f32 1.0, %v1131
  %v1133 = vrcp.pop %v1039
  %v1134 = vmul.f32 1.0, %v1133
  %v1135 = vrcp.pop %v1040
  %v1136 = vmul.f32 1.0, %v1135
  %v1137 = vrcp.pop %v1041
  %v1138 = vmul.f32 1.0, %v1137
  %v1139 = vrcp.pop %v1042
  %v1140 = vmul.f32 1.0, %v1139
  %v1141 = vrcp.pop %v1043
  %v1142 = vmul.f32 1.0, %v1141
  %v1143 = vrcp.pop %v1044
  %v1144 = vmul.f32 1.0, %v1143
  %v1145 = vrcp.pop %v1045
  %v1146 = vmul.f32 1.0, %v1145
  %v1147 = vrcp.pop %v1046
  %v1148 = vmul.f32 1.0, %v1147
  %v1149 = vrcp.pop %v1047
  %v1150 = vmul.f32 1.0, %v1149
  %v1151 = vrcp.pop %v1048
  %v1152 = vmul.f32 1.0, %v1151
  %v1153 = vrcp.pop %v1049
  %v1154 = vmul.f32 1.0, %v1153
  %v1155 = vrcp.pop %v1050
  %v1156 = vmul.f32 1.0, %v1155
  %v1157 = vrcp.pop %v1051
  %v1158 = vmul.f32 1.0, %v1157
  %v1159 = vrcp.pop %v1052
  %v1160 = vmul.f32 1.0, %v1159
  %v1161 = vrcp.pop %v1053
  %v1162 = vmul.f32 1.0, %v1161
  %v1163 = vrcp.pop %v1054
  %v1164 = vmul.f32 1.0, %v1163
  %v1165 = vrcp.pop %v1055
  %v1166 = vmul.f32 1.0, %v1165
  %v1167 = vrcp.pop %v1056
  %v1168 = vmul.f32 1.0, %v1167
  %v1169 = vrcp.pop %v1057
  %v1170 = vmul.f32 1.0, %v1169
  %v1171 = vrcp.pop %v1058
  %v1172 = vmul.f32 1.0, %v1171
  %v1173 = vrcp.pop %v1059
  %v1174 = vmul.f32 1.0, %v1173
  %v1175 = vrcp.pop %v1060
  %v1176 = vmul.f32 1.0, %v1175
  %v1177 = vrcp.pop %v1061
  %v1178 = vmul.f32 1.0, %v1177
  %v1179 = vrcp.pop %v1062
  %v1180 = vmul.f32 1.0, %v1179
  %v1181 = vrcp.pop %v1063
  %v1182 = vmul.f32 1.0, %v1181
  %v1183 = vrcp.pop %v1064
  %v1184 = vmul.f32 1.0, %v1183
  %v1185 = vrcp.pop %v1065
  %v1186 = vmul.f32 1.0, %v1185
  %v1187 = vrcp.pop %v1066
  %v1188 = vmul.f32 1.0, %v1187
  %v1189 = vrcp.pop %v1067
  %v1190 = vmul.f32 1.0, %v1189
  %v1191 = vrcp.pop %v1068
  %v1192 = vmul.f32 1.0, %v1191
  %v1193 = vrcp.pop %v1069
  %v1194 = vmul.f32 1.0, %v1193
  %v1195 = vrcp.pop %v1070
  %v1196 = vmul.f32 1.0, %v1195
  %v1197 = vrcp.pop %v1071
  %v1198 = vmul.f32 1.0, %v1197
  %v1199 = vrcp.pop %v1072
  %v1200 = vmul.f32 1.0, %v1199
  %v1201 = vmul.f32 %v753, %v1074
  %v1202 = vmul.f32 %v754, %v1076
  %v1203 = vmul.f32 %v755, %v1078
  %v1204 = vmul.f32 %v756, %v1080
  %v1205 = vmul.f32 %v757, %v1082
  %v1206 = vmul.f32 %v758, %v1084
  %v1207 = vmul.f32 %v759, %v1086
  %v1208 = vmul.f32 %v760, %v1088
  %v1209 = vmul.f32 %v761, %v1090
  %v1210 = vmul.f32 %v762, %v1092
  %v1211 = vmul.f32 %v763, %v1094
  %v1212 = vmul.f32 %v764, %v1096
  %v1213 = vmul.f32 %v765, %v1098
  %v1214 = vmul.f32 %v766, %v1100
  %v1215 = vmul.f32 %v767, %v1102
  %v1216 = vmul.f32 %v768, %v1104
  %v1217 = vmul.f32 %v769, %v1106
  %v1218 = vmul.f32 %v770, %v1108
  %v1219 = vmul.f32 %v771, %v1110
  %v1220 = vmul.f32 %v772, %v1112
  %v1221 = vmul.f32 %v773, %v1114
  %v1222 = vmul.f32 %v774, %v1116
  %v1223 = vmul.f32 %v775, %v1118
  %v1224 = vmul.f32 %v776, %v1120
  %v1225 = vmul.f32 %v777, %v1122
  %v1226 = vmul.f32 %v778, %v1124
  %v1227 = vmul.f32 %v779, %v1126
  %v1228 = vmul.f32 %v780, %v1128
  %v1229 = vmul.f32 %v781, %v1130
  %v1230 = vmul.f32 %v782, %v1132
  %v1231 = vmul.f32 %v783, %v1134
  %v1232 = vmul.f32 %v784, %v1136
  %v1233 = vmul.f32 %v785, %v1138
  %v1234 = vmul.f32 %v786, %v1140
  %v1235 = vmul.f32 %v787, %v1142
  %v1236 = vmul.f32 %v788, %v1144
  %v1237 = vmul.f32 %v789, %v1146
  %v1238 = vmul.f32 %v790, %v1148
  %v1239 = vmul.f32 %v791, %v1150
  %v1240 = vmul.f32 %v792, %v1152
  %v1241 = vmul.f32 %v793, %v1154
  %v1242 = vmul.f32 %v794, %v1156
  %v1243 = vmul.f32 %v795, %v1158
  %v1244 = vmul.f32 %v796, %v1160
  %v1245 = vmul.f32 %v797, %v1162
  %v1246 = vmul.f32 %v798, %v1164
  %v1247 = vmul.f32 %v799, %v1166
  %v1248 = vmul.f32 %v800, %v1168
  %v1249 = vmul.f32 %v801, %v1170
  %v1250 = vmul.f32 %v802, %v1172
  %v1251 = vmul.f32 %v803, %v1174
  %v1252 = vmul.f32 %v804, %v1176
  %v1253 = vmul.f32 %v805, %v1178
  %v1254 = vmul.f32 %v806, %v1180
  %v1255 = vmul.f32 %v807, %v1182
  %v1256 = vmul.f32 %v808, %v1184
  %v1257 = vmul.f32 %v809, %v1186
  %v1258 = vmul.f32 %v810, %v1188
  %v1259 = vmul.f32 %v811, %v1190
  %v1260 = vmul.f32 %v812, %v1192
  %v1261 = vmul.f32 %v813, %v1194
  %v1262 = vmul.f32 %v814, %v1196
  %v1263 = vmul.f32 %v815, %v1198
  %v1264 = vmul.f32 %v816, %v1200
  %1265 = vst.msk [vmem:[%s7] sm:$0xff] %vm97, %v1201
  %1266 = vst.msk [vmem:[%s7 + $0x8] sm:$0xff] %vm97, %v1202
  %1267 = vst.msk [vmem:[%s7 + $0x10] sm:$0xff] %vm97, %v1203
  %1268 = vst.msk [vmem:[%s7 + $0x18] sm:$0xff] %vm97, %v1204
  %1269 = vst.msk [vmem:[%s7 + $0x20] sm:$0xff] %vm97, %v1205
  %1270 = vst.msk [vmem:[%s7 + $0x28] sm:$0xff] %vm97, %v1206
  %1271 = vst.msk [vmem:[%s7 + $0x30] sm:$0xff] %vm97, %v1207
  %1272 = vst.msk [vmem:[%s7 + $0x38] sm:$0xff] %vm97, %v1208
  %1273 = vst.msk [vmem:[%s7 + $0x40] sm:$0xff] %vm97, %v1209
  %1274 = vst.msk [vmem:[%s7 + $0x48] sm:$0xff] %vm97, %v1210
  %1275 = vst.msk [vmem:[%s7 + $0x50] sm:$0xff] %vm97, %v1211
  %1276 = vst.msk [vmem:[%s7 + $0x58] sm:$0xff] %vm97, %v1212
  %1277 = vst.msk [vmem:[%s7 + $0x60] sm:$0xff] %vm97, %v1213
  %1278 = vst.msk [vmem:[%s7 + $0x68] sm:$0xff] %vm97, %v1214
  %1279 = vst.msk [vmem:[%s7 + $0x70] sm:$0xff] %vm97, %v1215
  %1280 = vst.msk [vmem:[%s7 + $0x78] sm:$0xff] %vm97, %v1216
  %1281 = vst.msk [vmem:[%s7 + $0x80] sm:$0xff] %vm97, %v1217
  %1282 = vst.msk [vmem:[%s7 + $0x88] sm:$0xff] %vm97, %v1218
  %1283 = vst.msk [vmem:[%s7 + $0x90] sm:$0xff] %vm97, %v1219
  %1284 = vst.msk [vmem:[%s7 + $0x98] sm:$0xff] %vm97, %v1220
  %1285 = vst.msk [vmem:[%s7 + $0xa0] sm:$0xff] %vm97, %v1221
  %1286 = vst.msk [vmem:[%s7 + $0xa8] sm:$0xff] %vm97, %v1222
  %1287 = vst.msk [vmem:[%s7 + $0xb0] sm:$0xff] %vm97, %v1223
  %1288 = vst.msk [vmem:[%s7 + $0xb8] sm:$0xff] %vm97, %v1224
  %1289 = vst.msk [vmem:[%s7 + $0xc0] sm:$0xff] %vm97, %v1225
  %1290 = vst.msk [vmem:[%s7 + $0xc8] sm:$0xff] %vm97, %v1226
  %1291 = vst.msk [vmem:[%s7 + $0xd0] sm:$0xff] %vm97, %v1227
  %1292 = vst.msk [vmem:[%s7 + $0xd8] sm:$0xff] %vm97, %v1228
  %1293 = vst.msk [vmem:[%s7 + $0xe0] sm:$0xff] %vm97, %v1229
  %1294 = vst.msk [vmem:[%s7 + $0xe8] sm:$0xff] %vm97, %v1230
  %1295 = vst.msk [vmem:[%s7 + $0xf0] sm:$0xff] %vm97, %v1231
  %1296 = vst.msk [vmem:[%s7 + $0xf8] sm:$0xff] %vm97, %v1232
  %1297 = vst.msk [vmem:[%s7 + $0x100] sm:$0xff] %vm97, %v1233
  %1298 = vst.msk [vmem:[%s7 + $0x108] sm:$0xff] %vm97, %v1234
  %1299 = vst.msk [vmem:[%s7 + $0x110] sm:$0xff] %vm97, %v1235
  %1300 = vst.msk [vmem:[%s7 + $0x118] sm:$0xff] %vm97, %v1236
  %1301 = vst.msk [vmem:[%s7 + $0x120] sm:$0xff] %vm97, %v1237
  %1302 = vst.msk [vmem:[%s7 + $0x128] sm:$0xff] %vm97, %v1238
  %1303 = vst.msk [vmem:[%s7 + $0x130] sm:$0xff] %vm97, %v1239
  %1304 = vst.msk [vmem:[%s7 + $0x138] sm:$0xff] %vm97, %v1240
  %1305 = vst.msk [vmem:[%s7 + $0x140] sm:$0xff] %vm97, %v1241
  %1306 = vst.msk [vmem:[%s7 + $0x148] sm:$0xff] %vm97, %v1242
  %1307 = vst.msk [vmem:[%s7 + $0x150] sm:$0xff] %vm97, %v1243
  %1308 = vst.msk [vmem:[%s7 + $0x158] sm:$0xff] %vm97, %v1244
  %1309 = vst.msk [vmem:[%s7 + $0x160] sm:$0xff] %vm97, %v1245
  %1310 = vst.msk [vmem:[%s7 + $0x168] sm:$0xff] %vm97, %v1246
  %1311 = vst.msk [vmem:[%s7 + $0x170] sm:$0xff] %vm97, %v1247
  %1312 = vst.msk [vmem:[%s7 + $0x178] sm:$0xff] %vm97, %v1248
  %1313 = vst.msk [vmem:[%s7 + $0x180] sm:$0xff] %vm97, %v1249
  %1314 = vst.msk [vmem:[%s7 + $0x188] sm:$0xff] %vm97, %v1250
  %1315 = vst.msk [vmem:[%s7 + $0x190] sm:$0xff] %vm97, %v1251
  %1316 = vst.msk [vmem:[%s7 + $0x198] sm:$0xff] %vm97, %v1252
  %1317 = vst.msk [vmem:[%s7 + $0x1a0] sm:$0xff] %vm97, %v1253
  %1318 = vst.msk [vmem:[%s7 + $0x1a8] sm:$0xff] %vm97, %v1254
  %1319 = vst.msk [vmem:[%s7 + $0x1b0] sm:$0xff] %vm97, %v1255
  %1320 = vst.msk [vmem:[%s7 + $0x1b8] sm:$0xff] %vm97, %v1256
  %1321 = vst.msk [vmem:[%s7 + $0x1c0] sm:$0xff] %vm97, %v1257
  %1322 = vst.msk [vmem:[%s7 + $0x1c8] sm:$0xff] %vm97, %v1258
  %1323 = vst.msk [vmem:[%s7 + $0x1d0] sm:$0xff] %vm97, %v1259
  %1324 = vst.msk [vmem:[%s7 + $0x1d8] sm:$0xff] %vm97, %v1260
  %1325 = vst.msk [vmem:[%s7 + $0x1e0] sm:$0xff] %vm97, %v1261
  %1326 = vst.msk [vmem:[%s7 + $0x1e8] sm:$0xff] %vm97, %v1262
  %1327 = vst.msk [vmem:[%s7 + $0x1f0] sm:$0xff] %vm97, %v1263
  %1328 = vst.msk [vmem:[%s7 + $0x1f8] sm:$0xff] %vm97, %v1264
  %1393 = vrot.lane.b32.xlu0 %v1201, 96
  %v1394 = vpop.permute.xlu0 %1393
  %1395 = vrot.lane.b32.xlu0 %v1202, 96
  %v1396 = vpop.permute.xlu0 %1395
  %1397 = vrot.lane.b32.xlu0 %v1203, 96
  %v1398 = vpop.permute.xlu0 %1397
  %1399 = vrot.lane.b32.xlu0 %v1204, 96
  %v1400 = vpop.permute.xlu0 %1399
  %1401 = vrot.lane.b32.xlu0 %v1205, 96
  %v1402 = vpop.permute.xlu0 %1401
  %1403 = vrot.lane.b32.xlu0 %v1206, 96
  %v1404 = vpop.permute.xlu0 %1403
  %1405 = vrot.lane.b32.xlu0 %v1207, 96
  %v1406 = vpop.permute.xlu0 %1405
  %1407 = vrot.lane.b32.xlu0 %v1208, 96
  %v1408 = vpop.permute.xlu0 %1407
  %1409 = vrot.lane.b32.xlu0 %v1209, 96
  %v1410 = vpop.permute.xlu0 %1409
  %1411 = vrot.lane.b32.xlu0 %v1210, 96
  %v1412 = vpop.permute.xlu0 %1411
  %1413 = vrot.lane.b32.xlu0 %v1211, 96
  %v1414 = vpop.permute.xlu0 %1413
  %1415 = vrot.lane.b32.xlu0 %v1212, 96
  %v1416 = vpop.permute.xlu0 %1415
  %1417 = vrot.lane.b32.xlu0 %v1213, 96
  %v1418 = vpop.permute.xlu0 %1417
  %1419 = vrot.lane.b32.xlu0 %v1214, 96
  %v1420 = vpop.permute.xlu0 %1419
  %1421 = vrot.lane.b32.xlu0 %v1215, 96
  %v1422 = vpop.permute.xlu0 %1421
  %1423 = vrot.lane.b32.xlu0 %v1216, 96
  %v1424 = vpop.permute.xlu0 %1423
  %1425 = vrot.lane.b32.xlu0 %v1217, 96
  %v1426 = vpop.permute.xlu0 %1425
  %1427 = vrot.lane.b32.xlu0 %v1218, 96
  %v1428 = vpop.permute.xlu0 %1427
  %1429 = vrot.lane.b32.xlu0 %v1219, 96
  %v1430 = vpop.permute.xlu0 %1429
  %1431 = vrot.lane.b32.xlu0 %v1220, 96
  %v1432 = vpop.permute.xlu0 %1431
  %1433 = vrot.lane.b32.xlu0 %v1221, 96
  %v1434 = vpop.permute.xlu0 %1433
  %1435 = vrot.lane.b32.xlu0 %v1222, 96
  %v1436 = vpop.permute.xlu0 %1435
  %1437 = vrot.lane.b32.xlu0 %v1223, 96
  %v1438 = vpop.permute.xlu0 %1437
  %1439 = vrot.lane.b32.xlu0 %v1224, 96
  %v1440 = vpop.permute.xlu0 %1439
  %1441 = vrot.lane.b32.xlu0 %v1225, 96
  %v1442 = vpop.permute.xlu0 %1441
  %1443 = vrot.lane.b32.xlu0 %v1226, 96
  %v1444 = vpop.permute.xlu0 %1443
  %1445 = vrot.lane.b32.xlu0 %v1227, 96
  %v1446 = vpop.permute.xlu0 %1445
  %1447 = vrot.lane.b32.xlu0 %v1228, 96
  %v1448 = vpop.permute.xlu0 %1447
  %1449 = vrot.lane.b32.xlu0 %v1229, 96
  %v1450 = vpop.permute.xlu0 %1449
  %1451 = vrot.lane.b32.xlu0 %v1230, 96
  %v1452 = vpop.permute.xlu0 %1451
  %1453 = vrot.lane.b32.xlu0 %v1231, 96
  %v1454 = vpop.permute.xlu0 %1453
  %1455 = vrot.lane.b32.xlu0 %v1232, 96
  %v1456 = vpop.permute.xlu0 %1455
  %1457 = vrot.lane.b32.xlu0 %v1233, 96
  %v1458 = vpop.permute.xlu0 %1457
  %1459 = vrot.lane.b32.xlu0 %v1234, 96
  %v1460 = vpop.permute.xlu0 %1459
  %1461 = vrot.lane.b32.xlu0 %v1235, 96
  %v1462 = vpop.permute.xlu0 %1461
  %1463 = vrot.lane.b32.xlu0 %v1236, 96
  %v1464 = vpop.permute.xlu0 %1463
  %1465 = vrot.lane.b32.xlu0 %v1237, 96
  %v1466 = vpop.permute.xlu0 %1465
  %1467 = vrot.lane.b32.xlu0 %v1238, 96
  %v1468 = vpop.permute.xlu0 %1467
  %1469 = vrot.lane.b32.xlu0 %v1239, 96
  %v1470 = vpop.permute.xlu0 %1469
  %1471 = vrot.lane.b32.xlu0 %v1240, 96
  %v1472 = vpop.permute.xlu0 %1471
  %1473 = vrot.lane.b32.xlu0 %v1241, 96
  %v1474 = vpop.permute.xlu0 %1473
  %1475 = vrot.lane.b32.xlu0 %v1242, 96
  %v1476 = vpop.permute.xlu0 %1475
  %1477 = vrot.lane.b32.xlu0 %v1243, 96
  %v1478 = vpop.permute.xlu0 %1477
  %1479 = vrot.lane.b32.xlu0 %v1244, 96
  %v1480 = vpop.permute.xlu0 %1479
  %1481 = vrot.lane.b32.xlu0 %v1245, 96
  %v1482 = vpop.permute.xlu0 %1481
  %1483 = vrot.lane.b32.xlu0 %v1246, 96
  %v1484 = vpop.permute.xlu0 %1483
  %1485 = vrot.lane.b32.xlu0 %v1247, 96
  %v1486 = vpop.permute.xlu0 %1485
  %1487 = vrot.lane.b32.xlu0 %v1248, 96
  %v1488 = vpop.permute.xlu0 %1487
  %1489 = vrot.lane.b32.xlu0 %v1249, 96
  %v1490 = vpop.permute.xlu0 %1489
  %1491 = vrot.lane.b32.xlu0 %v1250, 96
  %v1492 = vpop.permute.xlu0 %1491
  %1493 = vrot.lane.b32.xlu0 %v1251, 96
  %v1494 = vpop.permute.xlu0 %1493
  %1495 = vrot.lane.b32.xlu0 %v1252, 96
  %v1496 = vpop.permute.xlu0 %1495
  %1497 = vrot.lane.b32.xlu0 %v1253, 96
  %v1498 = vpop.permute.xlu0 %1497
  %1499 = vrot.lane.b32.xlu0 %v1254, 96
  %v1500 = vpop.permute.xlu0 %1499
  %1501 = vrot.lane.b32.xlu0 %v1255, 96
  %v1502 = vpop.permute.xlu0 %1501
  %1503 = vrot.lane.b32.xlu0 %v1256, 96
  %v1504 = vpop.permute.xlu0 %1503
  %1505 = vrot.lane.b32.xlu0 %v1257, 96
  %v1506 = vpop.permute.xlu0 %1505
  %1507 = vrot.lane.b32.xlu0 %v1258, 96
  %v1508 = vpop.permute.xlu0 %1507
  %1509 = vrot.lane.b32.xlu0 %v1259, 96
  %v1510 = vpop.permute.xlu0 %1509
  %1511 = vrot.lane.b32.xlu0 %v1260, 96
  %v1512 = vpop.permute.xlu0 %1511
  %1513 = vrot.lane.b32.xlu0 %v1261, 96
  %v1514 = vpop.permute.xlu0 %1513
  %1515 = vrot.lane.b32.xlu0 %v1262, 96
  %v1516 = vpop.permute.xlu0 %1515
  %1517 = vrot.lane.b32.xlu0 %v1263, 96
  %v1518 = vpop.permute.xlu0 %1517
  %1519 = vrot.lane.b32.xlu0 %v1264, 96
  %v1520 = vpop.permute.xlu0 %1519
  %vm1585 = vcmask 130048
  %1586 = vst.msk [vmem:[%s8] sm:$0xff] %vm1585, %v1394
  %1587 = vst.msk [vmem:[%s8 + $0x8] sm:$0xff] %vm1585, %v1396
  %1588 = vst.msk [vmem:[%s8 + $0x10] sm:$0xff] %vm1585, %v1398
  %1589 = vst.msk [vmem:[%s8 + $0x18] sm:$0xff] %vm1585, %v1400
  %1590 = vst.msk [vmem:[%s8 + $0x20] sm:$0xff] %vm1585, %v1402
  %1591 = vst.msk [vmem:[%s8 + $0x28] sm:$0xff] %vm1585, %v1404
  %1592 = vst.msk [vmem:[%s8 + $0x30] sm:$0xff] %vm1585, %v1406
  %1593 = vst.msk [vmem:[%s8 + $0x38] sm:$0xff] %vm1585, %v1408
  %1594 = vst.msk [vmem:[%s8 + $0x40] sm:$0xff] %vm1585, %v1410
  %1595 = vst.msk [vmem:[%s8 + $0x48] sm:$0xff] %vm1585, %v1412
  %1596 = vst.msk [vmem:[%s8 + $0x50] sm:$0xff] %vm1585, %v1414
  %1597 = vst.msk [vmem:[%s8 + $0x58] sm:$0xff] %vm1585, %v1416
  %1598 = vst.msk [vmem:[%s8 + $0x60] sm:$0xff] %vm1585, %v1418
  %1599 = vst.msk [vmem:[%s8 + $0x68] sm:$0xff] %vm1585, %v1420
  %1600 = vst.msk [vmem:[%s8 + $0x70] sm:$0xff] %vm1585, %v1422
  %1601 = vst.msk [vmem:[%s8 + $0x78] sm:$0xff] %vm1585, %v1424
  %1602 = vst.msk [vmem:[%s8 + $0x80] sm:$0xff] %vm1585, %v1426
  %1603 = vst.msk [vmem:[%s8 + $0x88] sm:$0xff] %vm1585, %v1428
  %1604 = vst.msk [vmem:[%s8 + $0x90] sm:$0xff] %vm1585, %v1430
  %1605 = vst.msk [vmem:[%s8 + $0x98] sm:$0xff] %vm1585, %v1432
  %1606 = vst.msk [vmem:[%s8 + $0xa0] sm:$0xff] %vm1585, %v1434
  %1607 = vst.msk [vmem:[%s8 + $0xa8] sm:$0xff] %vm1585, %v1436
  %1608 = vst.msk [vmem:[%s8 + $0xb0] sm:$0xff] %vm1585, %v1438
  %1609 = vst.msk [vmem:[%s8 + $0xb8] sm:$0xff] %vm1585, %v1440
  %1610 = vst.msk [vmem:[%s8 + $0xc0] sm:$0xff] %vm1585, %v1442
  %1611 = vst.msk [vmem:[%s8 + $0xc8] sm:$0xff] %vm1585, %v1444
  %1612 = vst.msk [vmem:[%s8 + $0xd0] sm:$0xff] %vm1585, %v1446
  %1613 = vst.msk [vmem:[%s8 + $0xd8] sm:$0xff] %vm1585, %v1448
  %1614 = vst.msk [vmem:[%s8 + $0xe0] sm:$0xff] %vm1585, %v1450
  %1615 = vst.msk [vmem:[%s8 + $0xe8] sm:$0xff] %vm1585, %v1452
  %1616 = vst.msk [vmem:[%s8 + $0xf0] sm:$0xff] %vm1585, %v1454
  %1617 = vst.msk [vmem:[%s8 + $0xf8] sm:$0xff] %vm1585, %v1456
  %1618 = vst.msk [vmem:[%s8 + $0x100] sm:$0xff] %vm1585, %v1458
  %1619 = vst.msk [vmem:[%s8 + $0x108] sm:$0xff] %vm1585, %v1460
  %1620 = vst.msk [vmem:[%s8 + $0x110] sm:$0xff] %vm1585, %v1462
  %1621 = vst.msk [vmem:[%s8 + $0x118] sm:$0xff] %vm1585, %v1464
  %1622 = vst.msk [vmem:[%s8 + $0x120] sm:$0xff] %vm1585, %v1466
  %1623 = vst.msk [vmem:[%s8 + $0x128] sm:$0xff] %vm1585, %v1468
  %1624 = vst.msk [vmem:[%s8 + $0x130] sm:$0xff] %vm1585, %v1470
  %1625 = vst.msk [vmem:[%s8 + $0x138] sm:$0xff] %vm1585, %v1472
  %1626 = vst.msk [vmem:[%s8 + $0x140] sm:$0xff] %vm1585, %v1474
  %1627 = vst.msk [vmem:[%s8 + $0x148] sm:$0xff] %vm1585, %v1476
  %1628 = vst.msk [vmem:[%s8 + $0x150] sm:$0xff] %vm1585, %v1478
  %1629 = vst.msk [vmem:[%s8 + $0x158] sm:$0xff] %vm1585, %v1480
  %1630 = vst.msk [vmem:[%s8 + $0x160] sm:$0xff] %vm1585, %v1482
  %1631 = vst.msk [vmem:[%s8 + $0x168] sm:$0xff] %vm1585, %v1484
  %1632 = vst.msk [vmem:[%s8 + $0x170] sm:$0xff] %vm1585, %v1486
  %1633 = vst.msk [vmem:[%s8 + $0x178] sm:$0xff] %vm1585, %v1488
  %1634 = vst.msk [vmem:[%s8 + $0x180] sm:$0xff] %vm1585, %v1490
  %1635 = vst.msk [vmem:[%s8 + $0x188] sm:$0xff] %vm1585, %v1492
  %1636 = vst.msk [vmem:[%s8 + $0x190] sm:$0xff] %vm1585, %v1494
  %1637 = vst.msk [vmem:[%s8 + $0x198] sm:$0xff] %vm1585, %v1496
  %1638 = vst.msk [vmem:[%s8 + $0x1a0] sm:$0xff] %vm1585, %v1498
  %1639 = vst.msk [vmem:[%s8 + $0x1a8] sm:$0xff] %vm1585, %v1500
  %1640 = vst.msk [vmem:[%s8 + $0x1b0] sm:$0xff] %vm1585, %v1502
  %1641 = vst.msk [vmem:[%s8 + $0x1b8] sm:$0xff] %vm1585, %v1504
  %1642 = vst.msk [vmem:[%s8 + $0x1c0] sm:$0xff] %vm1585, %v1506
  %1643 = vst.msk [vmem:[%s8 + $0x1c8] sm:$0xff] %vm1585, %v1508
  %1644 = vst.msk [vmem:[%s8 + $0x1d0] sm:$0xff] %vm1585, %v1510
  %1645 = vst.msk [vmem:[%s8 + $0x1d8] sm:$0xff] %vm1585, %v1512
  %1646 = vst.msk [vmem:[%s8 + $0x1e0] sm:$0xff] %vm1585, %v1514
  %1647 = vst.msk [vmem:[%s8 + $0x1e8] sm:$0xff] %vm1585, %v1516
  %1648 = vst.msk [vmem:[%s8 + $0x1f0] sm:$0xff] %vm1585, %v1518
  %1649 = vst.msk [vmem:[%s8 + $0x1f8] sm:$0xff] %vm1585, %v1520
  %v1650 = vld [vmem:[%s4] sm:$0xff]
  %v1651 = vld [vmem:[%s4 + $0x8] sm:$0xff]
  %v1652 = vsel %vm1585, %v1394, 0
  %v1654 = vsel %vm1585, %v1396, 0
  %v1656 = vsel %vm1585, %v1398, 0
  %v1658 = vsel %vm1585, %v1400, 0
  %v1660 = vsel %vm1585, %v1402, 0
  %v1662 = vsel %vm1585, %v1404, 0
  %v1664 = vsel %vm1585, %v1406, 0
  %v1666 = vsel %vm1585, %v1408, 0
  %v1668 = vsel %vm1585, %v1410, 0
  %v1670 = vsel %vm1585, %v1412, 0
  %v1672 = vsel %vm1585, %v1414, 0
  %v1674 = vsel %vm1585, %v1416, 0
  %v1676 = vsel %vm1585, %v1418, 0
  %v1678 = vsel %vm1585, %v1420, 0
  %v1680 = vsel %vm1585, %v1422, 0
  %v1682 = vsel %vm1585, %v1424, 0
  %v1684 = vsel %vm1585, %v1426, 0
  %v1686 = vsel %vm1585, %v1428, 0
  %v1688 = vsel %vm1585, %v1430, 0
  %v1690 = vsel %vm1585, %v1432, 0
  %v1692 = vsel %vm1585, %v1434, 0
  %v1694 = vsel %vm1585, %v1436, 0
  %v1696 = vsel %vm1585, %v1438, 0
  %v1698 = vsel %vm1585, %v1440, 0
  %v1700 = vsel %vm1585, %v1442, 0
  %v1702 = vsel %vm1585, %v1444, 0
  %v1704 = vsel %vm1585, %v1446, 0
  %v1706 = vsel %vm1585, %v1448, 0
  %v1708 = vsel %vm1585, %v1450, 0
  %v1710 = vsel %vm1585, %v1452, 0
  %v1712 = vsel %vm1585, %v1454, 0
  %v1714 = vsel %vm1585, %v1456, 0
  %v1716 = vsel %vm1585, %v1458, 0
  %v1718 = vsel %vm1585, %v1460, 0
  %v1720 = vsel %vm1585, %v1462, 0
  %v1722 = vsel %vm1585, %v1464, 0
  %v1724 = vsel %vm1585, %v1466, 0
  %v1726 = vsel %vm1585, %v1468, 0
  %v1728 = vsel %vm1585, %v1470, 0
  %v1730 = vsel %vm1585, %v1472, 0
  %v1732 = vsel %vm1585, %v1474, 0
  %v1734 = vsel %vm1585, %v1476, 0
  %v1736 = vsel %vm1585, %v1478, 0
  %v1738 = vsel %vm1585, %v1480, 0
  %v1740 = vsel %vm1585, %v1482, 0
  %v1742 = vsel %vm1585, %v1484, 0
  %v1744 = vsel %vm1585, %v1486, 0
  %v1746 = vsel %vm1585, %v1488, 0
  %v1748 = vsel %vm1585, %v1490, 0
  %v1750 = vsel %vm1585, %v1492, 0
  %v1752 = vsel %vm1585, %v1494, 0
  %v1754 = vsel %vm1585, %v1496, 0
  %v1756 = vsel %vm1585, %v1498, 0
  %v1758 = vsel %vm1585, %v1500, 0
  %v1760 = vsel %vm1585, %v1502, 0
  %v1762 = vsel %vm1585, %v1504, 0
  %v1764 = vsel %vm1585, %v1506, 0
  %v1766 = vsel %vm1585, %v1508, 0
  %v1768 = vsel %vm1585, %v1510, 0
  %v1770 = vsel %vm1585, %v1512, 0
  %v1772 = vsel %vm1585, %v1514, 0
  %v1774 = vsel %vm1585, %v1516, 0
  %v1776 = vsel %vm1585, %v1518, 0
  %v1778 = vsel %vm1585, %v1520, 0
  %1780 = vmatprep.subr.mxu0 0.0
  %1781 = vmatpush1.msra.mxu0 %v1650
  %1782 = vmatprep.subr.mxu0 0.0
  %1783 = vmatpush1.msra.mxu0 %v1651
  %1784 = vmatprep.subr.mxu0 0.0
  %1785 = vmatpush1.msra.mxu0 0.0
  %1786 = vmatprep.subr.mxu0 0.0
  %1787 = vmatpush1.msra.mxu0 0.0
  %1788 = vmatprep.subr.mxu0 0.0
  %1789 = vmatpush1.msra.mxu0 0.0
  %1790 = vmatprep.subr.mxu0 0.0
  %1791 = vmatpush1.msra.mxu0 0.0
  %1792 = vmatprep.subr.mxu0 0.0
  %1793 = vmatpush1.msra.mxu0 0.0
  %1794 = vmatprep.subr.mxu0 0.0
  %1795 = vmatpush1.msra.mxu0 0.0
  %1796 = vmatprep.subr.mxu0 0.0
  %1797 = vmatpush1.msra.mxu0 0.0
  %1798 = vmatprep.subr.mxu0 0.0
  %1799 = vmatpush1.msra.mxu0 0.0
  %1800 = vmatprep.subr.mxu0 0.0
  %1801 = vmatpush1.msra.mxu0 0.0
  %1802 = vmatprep.subr.mxu0 0.0
  %1803 = vmatpush1.msra.mxu0 0.0
  %1804 = vmatprep.subr.mxu0 0.0
  %1805 = vmatpush1.msra.mxu0 0.0
  %1806 = vmatprep.subr.mxu0 0.0
  %1807 = vmatpush1.msra.mxu0 0.0
  %1808 = vmatprep.subr.mxu0 0.0
  %1809 = vmatpush1.msra.mxu0 0.0
  %1810 = vmatprep.subr.mxu0 0.0
  %1811 = vmatpush1.msra.mxu0 0.0
  %1812 = vmatprep.subr.mxu0 0.0
  %1813 = vmatpush1.msra.mxu0 0.0
  %1814 = vmatprep.subr.mxu0 0.0
  %1815 = vmatpush1.msra.mxu0 0.0
  %1816 = vmatprep.subr.mxu0 0.0
  %1817 = vmatpush1.msra.mxu0 0.0
  %1818 = vmatprep.subr.mxu0 0.0
  %1819 = vmatpush1.msra.mxu0 0.0
  %1820 = vmatprep.subr.mxu0 0.0
  %1821 = vmatpush1.msra.mxu0 0.0
  %1822 = vmatprep.subr.mxu0 0.0
  %1823 = vmatpush1.msra.mxu0 0.0
  %1824 = vmatprep.subr.mxu0 0.0
  %1825 = vmatpush1.msra.mxu0 0.0
  %1826 = vmatprep.subr.mxu0 0.0
  %1827 = vmatpush1.msra.mxu0 0.0
  %1828 = vmatprep.subr.mxu0 0.0
  %1829 = vmatpush1.msra.mxu0 0.0
  %1830 = vmatprep.subr.mxu0 0.0
  %1831 = vmatpush1.msra.mxu0 0.0
  %1832 = vmatprep.subr.mxu0 0.0
  %1833 = vmatpush1.msra.mxu0 0.0
  %1834 = vmatprep.subr.mxu0 0.0
  %1835 = vmatpush1.msra.mxu0 0.0
  %1836 = vmatprep.subr.mxu0 0.0
  %1837 = vmatpush1.msra.mxu0 0.0
  %1838 = vmatprep.subr.mxu0 0.0
  %1839 = vmatpush1.msra.mxu0 0.0
  %1840 = vmatprep.subr.mxu0 0.0
  %1841 = vmatpush1.msra.mxu0 0.0
  %1842 = vmatprep.subr.mxu0 0.0
  %1843 = vmatpush1.msra.mxu0 0.0
  %1844 = vmatprep.mubr.f32.mxu0 0.0
  %1845 = vmatmul.mubr.f32.gmra.mrb[0].mxu0 %v1652
  %v1846 = vpop.f32.mrb[0].mxu0
  %v1847 = vadd.f32 0.0, %v1846
  %v1848 = vpop.f32.mrb[0].mxu0
  %1849 = vmatprep.mubr.f32.mxu0 0.0
  %1850 = vmatmul.mubr.f32.gmra.mrb[0].mxu0 %v1654
  %v1851 = vpop.f32.mrb[0].mxu0
  %v1852 = vadd.f32 0.0, %v1851
  %v1853 = vpop.f32.mrb[0].mxu0
  %1854 = vmatprep.mubr.f32.mxu0 0.0
  %1855 = vmatmul.mubr.f32.gmra.mrb[0].mxu0 %v1656
  %v1856 = vpop.f32.mrb[0].mxu0
  %v1857 = vadd.f32 0.0, %v1856
  %v1858 = vpop.f32.mrb[0].mxu0
  %1859 = vmatprep.mubr.f32.mxu0 0.0
  %1860 = vmatmul.mubr.f32.gmra.mrb[0].mxu0 %v1658
  %v1861 = vpop.f32.mrb[0].mxu0
  %v1862 = vadd.f32 0.0, %v1861
  %v1863 = vpop.f32.mrb[0].mxu0
  %1864 = vmatprep.mubr.f32.mxu0 0.0
  %1865 = vmatmul.mubr.f32.gmra.mrb[0].mxu0 %v1660
  %v1866 = vpop.f32.mrb[0].mxu0
  %v1867 = vadd.f32 0.0, %v1866
  %v1868 = vpop.f32.mrb[0].mxu0
  %1869 = vmatprep.mubr.f32.mxu0 0.0
  %1870 = vmatmul.mubr.f32.gmra.mrb[0].mxu0 %v1662
  %v1871 = vpop.f32.mrb[0].mxu0
  %v1872 = vadd.f32 0.0, %v1871
  %v1873 = vpop.f32.mrb[0].mxu0
  %1874 = vmatprep.mubr.f32.mxu0 0.0
  %1875 = vmatmul.mubr.f32.gmra.mrb[0].mxu0 %v1664
  %v1876 = vpop.f32.mrb[0].mxu0
  %v1877 = vadd.f32 0.0, %v1876
  %v1878 = vpop.f32.mrb[0].mxu0
  %1879 = vmatprep.mubr.f32.mxu0 0.0
  %1880 = vmatmul.mubr.f32.gmra.mrb[0].mxu0 %v1666
  %v1881 = vpop.f32.mrb[0].mxu0
  %v1882 = vadd.f32 0.0, %v1881
  %v1883 = vpop.f32.mrb[0].mxu0
  %1884 = vmatprep.mubr.f32.mxu0 0.0
  %1885 = vmatmul.mubr.f32.gmra.mrb[0].mxu0 %v1668
  %v1886 = vpop.f32.mrb[0].mxu0
  %v1887 = vadd.f32 0.0, %v1886
  %v1888 = vpop.f32.mrb[0].mxu0
  %1889 = vmatprep.mubr.f32.mxu0 0.0
  %1890 = vmatmul.mubr.f32.gmra.mrb[0].mxu0 %v1670
  %v1891 = vpop.f32.mrb[0].mxu0
  %v1892 = vadd.f32 0.0, %v1891
  %v1893 = vpop.f32.mrb[0].mxu0
  %1894 = vmatprep.mubr.f32.mxu0 0.0
  %1895 = vmatmul.mubr.f32.gmra.mrb[0].mxu0 %v1672
  %v1896 = vpop.f32.mrb[0].mxu0
  %v1897 = vadd.f32 0.0, %v1896
  %v1898 = vpop.f32.mrb[0].mxu0
  %1899 = vmatprep.mubr.f32.mxu0 0.0
  %1900 = vmatmul.mubr.f32.gmra.mrb[0].mxu0 %v1674
  %v1901 = vpop.f32.mrb[0].mxu0
  %v1902 = vadd.f32 0.0, %v1901
  %v1903 = vpop.f32.mrb[0].mxu0
  %1904 = vmatprep.mubr.f32.mxu0 0.0
  %1905 = vmatmul.mubr.f32.gmra.mrb[0].mxu0 %v1676
  %v1906 = vpop.f32.mrb[0].mxu0
  %v1907 = vadd.f32 0.0, %v1906
  %v1908 = vpop.f32.mrb[0].mxu0
  %1909 = vmatprep.mubr.f32.mxu0 0.0
  %1910 = vmatmul.mubr.f32.gmra.mrb[0].mxu0 %v1678
  %v1911 = vpop.f32.mrb[0].mxu0
  %v1912 = vadd.f32 0.0, %v1911
  %v1913 = vpop.f32.mrb[0].mxu0
  %1914 = vmatprep.mubr.f32.mxu0 0.0
  %1915 = vmatmul.mubr.f32.gmra.mrb[0].mxu0 %v1680
  %v1916 = vpop.f32.mrb[0].mxu0
  %v1917 = vadd.f32 0.0, %v1916
  %v1918 = vpop.f32.mrb[0].mxu0
  %1919 = vmatprep.mubr.f32.mxu0 0.0
  %1920 = vmatmul.mubr.f32.gmra.mrb[0].mxu0 %v1682
  %v1921 = vpop.f32.mrb[0].mxu0
  %v1922 = vadd.f32 0.0, %v1921
  %v1923 = vpop.f32.mrb[0].mxu0
  %1924 = vmatprep.mubr.f32.mxu0 0.0
  %1925 = vmatmul.mubr.f32.gmra.mrb[0].mxu0 %v1684
  %v1926 = vpop.f32.mrb[0].mxu0
  %v1927 = vadd.f32 0.0, %v1926
  %v1928 = vpop.f32.mrb[0].mxu0
  %1929 = vmatprep.mubr.f32.mxu0 0.0
  %1930 = vmatmul.mubr.f32.gmra.mrb[0].mxu0 %v1686
  %v1931 = vpop.f32.mrb[0].mxu0
  %v1932 = vadd.f32 0.0, %v1931
  %v1933 = vpop.f32.mrb[0].mxu0
  %1934 = vmatprep.mubr.f32.mxu0 0.0
  %1935 = vmatmul.mubr.f32.gmra.mrb[0].mxu0 %v1688
  %v1936 = vpop.f32.mrb[0].mxu0
  %v1937 = vadd.f32 0.0, %v1936
  %v1938 = vpop.f32.mrb[0].mxu0
  %1939 = vmatprep.mubr.f32.mxu0 0.0
  %1940 = vmatmul.mubr.f32.gmra.mrb[0].mxu0 %v1690
  %v1941 = vpop.f32.mrb[0].mxu0
  %v1942 = vadd.f32 0.0, %v1941
  %v1943 = vpop.f32.mrb[0].mxu0
  %1944 = vmatprep.mubr.f32.mxu0 0.0
  %1945 = vmatmul.mubr.f32.gmra.mrb[0].mxu0 %v1692
  %v1946 = vpop.f32.mrb[0].mxu0
  %v1947 = vadd.f32 0.0, %v1946
  %v1948 = vpop.f32.mrb[0].mxu0
  %1949 = vmatprep.mubr.f32.mxu0 0.0
  %1950 = vmatmul.mubr.f32.gmra.mrb[0].mxu0 %v1694
  %v1951 = vpop.f32.mrb[0].mxu0
  %v1952 = vadd.f32 0.0, %v1951
  %v1953 = vpop.f32.mrb[0].mxu0
  %1954 = vmatprep.mubr.f32.mxu0 0.0
  %1955 = vmatmul.mubr.f32.gmra.mrb[0].mxu0 %v1696
  %v1956 = vpop.f32.mrb[0].mxu0
  %v1957 = vadd.f32 0.0, %v1956
  %v1958 = vpop.f32.mrb[0].mxu0
  %1959 = vmatprep.mubr.f32.mxu0 0.0
  %1960 = vmatmul.mubr.f32.gmra.mrb[0].mxu0 %v1698
  %v1961 = vpop.f32.mrb[0].mxu0
  %v1962 = vadd.f32 0.0, %v1961
  %v1963 = vpop.f32.mrb[0].mxu0
  %1964 = vmatprep.mubr.f32.mxu0 0.0
  %1965 = vmatmul.mubr.f32.gmra.mrb[0].mxu0 %v1700
  %v1966 = vpop.f32.mrb[0].mxu0
  %v1967 = vadd.f32 0.0, %v1966
  %v1968 = vpop.f32.mrb[0].mxu0
  %1969 = vmatprep.mubr.f32.mxu0 0.0
  %1970 = vmatmul.mubr.f32.gmra.mrb[0].mxu0 %v1702
  %v1971 = vpop.f32.mrb[0].mxu0
  %v1972 = vadd.f32 0.0, %v1971
  %v1973 = vpop.f32.mrb[0].mxu0
  %1974 = vmatprep.mubr.f32.mxu0 0.0
  %1975 = vmatmul.mubr.f32.gmra.mrb[0].mxu0 %v1704
  %v1976 = vpop.f32.mrb[0].mxu0
  %v1977 = vadd.f32 0.0, %v1976
  %v1978 = vpop.f32.mrb[0].mxu0
  %1979 = vmatprep.mubr.f32.mxu0 0.0
  %1980 = vmatmul.mubr.f32.gmra.mrb[0].mxu0 %v1706
  %v1981 = vpop.f32.mrb[0].mxu0
  %v1982 = vadd.f32 0.0, %v1981
  %v1983 = vpop.f32.mrb[0].mxu0
  %1984 = vmatprep.mubr.f32.mxu0 0.0
  %1985 = vmatmul.mubr.f32.gmra.mrb[0].mxu0 %v1708
  %v1986 = vpop.f32.mrb[0].mxu0
  %v1987 = vadd.f32 0.0, %v1986
  %v1988 = vpop.f32.mrb[0].mxu0
  %1989 = vmatprep.mubr.f32.mxu0 0.0
  %1990 = vmatmul.mubr.f32.gmra.mrb[0].mxu0 %v1710
  %v1991 = vpop.f32.mrb[0].mxu0
  %v1992 = vadd.f32 0.0, %v1991
  %v1993 = vpop.f32.mrb[0].mxu0
  %1994 = vmatprep.mubr.f32.mxu0 0.0
  %1995 = vmatmul.mubr.f32.gmra.mrb[0].mxu0 %v1712
  %v1996 = vpop.f32.mrb[0].mxu0
  %v1997 = vadd.f32 0.0, %v1996
  %v1998 = vpop.f32.mrb[0].mxu0
  %1999 = vmatprep.mubr.f32.mxu0 0.0
  %2000 = vmatmul.mubr.f32.gmra.mrb[0].mxu0 %v1714
  %v2001 = vpop.f32.mrb[0].mxu0
  %v2002 = vadd.f32 0.0, %v2001
  %v2003 = vpop.f32.mrb[0].mxu0
  %2004 = vmatprep.mubr.f32.mxu0 0.0
  %2005 = vmatmul.mubr.f32.gmra.mrb[0].mxu0 %v1716
  %v2006 = vpop.f32.mrb[0].mxu0
  %v2007 = vadd.f32 0.0, %v2006
  %v2008 = vpop.f32.mrb[0].mxu0
  %2009 = vmatprep.mubr.f32.mxu0 0.0
  %2010 = vmatmul.mubr.f32.gmra.mrb[0].mxu0 %v1718
  %v2011 = vpop.f32.mrb[0].mxu0
  %v2012 = vadd.f32 0.0, %v2011
  %v2013 = vpop.f32.mrb[0].mxu0
  %2014 = vmatprep.mubr.f32.mxu0 0.0
  %2015 = vmatmul.mubr.f32.gmra.mrb[0].mxu0 %v1720
  %v2016 = vpop.f32.mrb[0].mxu0
  %v2017 = vadd.f32 0.0, %v2016
  %v2018 = vpop.f32.mrb[0].mxu0
  %2019 = vmatprep.mubr.f32.mxu0 0.0
  %2020 = vmatmul.mubr.f32.gmra.mrb[0].mxu0 %v1722
  %v2021 = vpop.f32.mrb[0].mxu0
  %v2022 = vadd.f32 0.0, %v2021
  %v2023 = vpop.f32.mrb[0].mxu0
  %2024 = vmatprep.mubr.f32.mxu0 0.0
  %2025 = vmatmul.mubr.f32.gmra.mrb[0].mxu0 %v1724
  %v2026 = vpop.f32.mrb[0].mxu0
  %v2027 = vadd.f32 0.0, %v2026
  %v2028 = vpop.f32.mrb[0].mxu0
  %2029 = vmatprep.mubr.f32.mxu0 0.0
  %2030 = vmatmul.mubr.f32.gmra.mrb[0].mxu0 %v1726
  %v2031 = vpop.f32.mrb[0].mxu0
  %v2032 = vadd.f32 0.0, %v2031
  %v2033 = vpop.f32.mrb[0].mxu0
  %2034 = vmatprep.mubr.f32.mxu0 0.0
  %2035 = vmatmul.mubr.f32.gmra.mrb[0].mxu0 %v1728
  %v2036 = vpop.f32.mrb[0].mxu0
  %v2037 = vadd.f32 0.0, %v2036
  %v2038 = vpop.f32.mrb[0].mxu0
  %2039 = vmatprep.mubr.f32.mxu0 0.0
  %2040 = vmatmul.mubr.f32.gmra.mrb[0].mxu0 %v1730
  %v2041 = vpop.f32.mrb[0].mxu0
  %v2042 = vadd.f32 0.0, %v2041
  %v2043 = vpop.f32.mrb[0].mxu0
  %2044 = vmatprep.mubr.f32.mxu0 0.0
  %2045 = vmatmul.mubr.f32.gmra.mrb[0].mxu0 %v1732
  %v2046 = vpop.f32.mrb[0].mxu0
  %v2047 = vadd.f32 0.0, %v2046
  %v2048 = vpop.f32.mrb[0].mxu0
  %2049 = vmatprep.mubr.f32.mxu0 0.0
  %2050 = vmatmul.mubr.f32.gmra.mrb[0].mxu0 %v1734
  %v2051 = vpop.f32.mrb[0].mxu0
  %v2052 = vadd.f32 0.0, %v2051
  %v2053 = vpop.f32.mrb[0].mxu0
  %2054 = vmatprep.mubr.f32.mxu0 0.0
  %2055 = vmatmul.mubr.f32.gmra.mrb[0].mxu0 %v1736
  %v2056 = vpop.f32.mrb[0].mxu0
  %v2057 = vadd.f32 0.0, %v2056
  %v2058 = vpop.f32.mrb[0].mxu0
  %2059 = vmatprep.mubr.f32.mxu0 0.0
  %2060 = vmatmul.mubr.f32.gmra.mrb[0].mxu0 %v1738
  %v2061 = vpop.f32.mrb[0].mxu0
  %v2062 = vadd.f32 0.0, %v2061
  %v2063 = vpop.f32.mrb[0].mxu0
  %2064 = vmatprep.mubr.f32.mxu0 0.0
  %2065 = vmatmul.mubr.f32.gmra.mrb[0].mxu0 %v1740
  %v2066 = vpop.f32.mrb[0].mxu0
  %v2067 = vadd.f32 0.0, %v2066
  %v2068 = vpop.f32.mrb[0].mxu0
  %2069 = vmatprep.mubr.f32.mxu0 0.0
  %2070 = vmatmul.mubr.f32.gmra.mrb[0].mxu0 %v1742
  %v2071 = vpop.f32.mrb[0].mxu0
  %v2072 = vadd.f32 0.0, %v2071
  %v2073 = vpop.f32.mrb[0].mxu0
  %2074 = vmatprep.mubr.f32.mxu0 0.0
  %2075 = vmatmul.mubr.f32.gmra.mrb[0].mxu0 %v1744
  %v2076 = vpop.f32.mrb[0].mxu0
  %v2077 = vadd.f32 0.0, %v2076
  %v2078 = vpop.f32.mrb[0].mxu0
  %2079 = vmatprep.mubr.f32.mxu0 0.0
  %2080 = vmatmul.mubr.f32.gmra.mrb[0].mxu0 %v1746
  %v2081 = vpop.f32.mrb[0].mxu0
  %v2082 = vadd.f32 0.0, %v2081
  %v2083 = vpop.f32.mrb[0].mxu0
  %2084 = vmatprep.mubr.f32.mxu0 0.0
  %2085 = vmatmul.mubr.f32.gmra.mrb[0].mxu0 %v1748
  %v2086 = vpop.f32.mrb[0].mxu0
  %v2087 = vadd.f32 0.0, %v2086
  %v2088 = vpop.f32.mrb[0].mxu0
  %2089 = vmatprep.mubr.f32.mxu0 0.0
  %2090 = vmatmul.mubr.f32.gmra.mrb[0].mxu0 %v1750
  %v2091 = vpop.f32.mrb[0].mxu0
  %v2092 = vadd.f32 0.0, %v2091
  %v2093 = vpop.f32.mrb[0].mxu0
  %2094 = vmatprep.mubr.f32.mxu0 0.0
  %2095 = vmatmul.mubr.f32.gmra.mrb[0].mxu0 %v1752
  %v2096 = vpop.f32.mrb[0].mxu0
  %v2097 = vadd.f32 0.0, %v2096
  %v2098 = vpop.f32.mrb[0].mxu0
  %2099 = vmatprep.mubr.f32.mxu0 0.0
  %2100 = vmatmul.mubr.f32.gmra.mrb[0].mxu0 %v1754
  %v2101 = vpop.f32.mrb[0].mxu0
  %v2102 = vadd.f32 0.0, %v2101
  %v2103 = vpop.f32.mrb[0].mxu0
  %2104 = vmatprep.mubr.f32.mxu0 0.0
  %2105 = vmatmul.mubr.f32.gmra.mrb[0].mxu0 %v1756
  %v2106 = vpop.f32.mrb[0].mxu0
  %v2107 = vadd.f32 0.0, %v2106
  %v2108 = vpop.f32.mrb[0].mxu0
  %2109 = vmatprep.mubr.f32.mxu0 0.0
  %2110 = vmatmul.mubr.f32.gmra.mrb[0].mxu0 %v1758
  %v2111 = vpop.f32.mrb[0].mxu0
  %v2112 = vadd.f32 0.0, %v2111
  %v2113 = vpop.f32.mrb[0].mxu0
  %2114 = vmatprep.mubr.f32.mxu0 0.0
  %2115 = vmatmul.mubr.f32.gmra.mrb[0].mxu0 %v1760
  %v2116 = vpop.f32.mrb[0].mxu0
  %v2117 = vadd.f32 0.0, %v2116
  %v2118 = vpop.f32.mrb[0].mxu0
  %2119 = vmatprep.mubr.f32.mxu0 0.0
  %2120 = vmatmul.mubr.f32.gmra.mrb[0].mxu0 %v1762
  %v2121 = vpop.f32.mrb[0].mxu0
  %v2122 = vadd.f32 0.0, %v2121
  %v2123 = vpop.f32.mrb[0].mxu0
  %2124 = vmatprep.mubr.f32.mxu0 0.0
  %2125 = vmatmul.mubr.f32.gmra.mrb[0].mxu0 %v1764
  %v2126 = vpop.f32.mrb[0].mxu0
  %v2127 = vadd.f32 0.0, %v2126
  %v2128 = vpop.f32.mrb[0].mxu0
  %2129 = vmatprep.mubr.f32.mxu0 0.0
  %2130 = vmatmul.mubr.f32.gmra.mrb[0].mxu0 %v1766
  %v2131 = vpop.f32.mrb[0].mxu0
  %v2132 = vadd.f32 0.0, %v2131
  %v2133 = vpop.f32.mrb[0].mxu0
  %2134 = vmatprep.mubr.f32.mxu0 0.0
  %2135 = vmatmul.mubr.f32.gmra.mrb[0].mxu0 %v1768
  %v2136 = vpop.f32.mrb[0].mxu0
  %v2137 = vadd.f32 0.0, %v2136
  %v2138 = vpop.f32.mrb[0].mxu0
  %2139 = vmatprep.mubr.f32.mxu0 0.0
  %2140 = vmatmul.mubr.f32.gmra.mrb[0].mxu0 %v1770
  %v2141 = vpop.f32.mrb[0].mxu0
  %v2142 = vadd.f32 0.0, %v2141
  %v2143 = vpop.f32.mrb[0].mxu0
  %2144 = vmatprep.mubr.f32.mxu0 0.0
  %2145 = vmatmul.mubr.f32.gmra.mrb[0].mxu0 %v1772
  %v2146 = vpop.f32.mrb[0].mxu0
  %v2147 = vadd.f32 0.0, %v2146
  %v2148 = vpop.f32.mrb[0].mxu0
  %2149 = vmatprep.mubr.f32.mxu0 0.0
  %2150 = vmatmul.mubr.f32.gmra.mrb[0].mxu0 %v1774
  %v2151 = vpop.f32.mrb[0].mxu0
  %v2152 = vadd.f32 0.0, %v2151
  %v2153 = vpop.f32.mrb[0].mxu0
  %2154 = vmatprep.mubr.f32.mxu0 0.0
  %2155 = vmatmul.mubr.f32.gmra.mrb[0].mxu0 %v1776
  %v2156 = vpop.f32.mrb[0].mxu0
  %v2157 = vadd.f32 0.0, %v2156
  %v2158 = vpop.f32.mrb[0].mxu0
  %2159 = vmatprep.mubr.f32.mxu0 0.0
  %2160 = vmatmul.mubr.f32.gmra.mrb[0].mxu0 %v1778
  %v2161 = vpop.f32.mrb[0].mxu0
  %v2162 = vadd.f32 0.0, %v2161
  %v2163 = vpop.f32.mrb[0].mxu0
  %2164 = vdwg.mxu0
  %v2165 = vld [vmem:[%s5] sm:$0x1]
  %v2167 = vlaneseq
  %v2168 = vshrl.u32 %v2167, 7
  %v2169 = vsub.s32 0, %v2168
  %v2170 = vrot.slane %v2165, %v2169
  %v2172 = vmul.f32 %v1847, %v2170
  %v2173 = vmul.f32 %v1852, %v2170
  %v2174 = vmul.f32 %v1857, %v2170
  %v2175 = vmul.f32 %v1862, %v2170
  %v2176 = vmul.f32 %v1867, %v2170
  %v2177 = vmul.f32 %v1872, %v2170
  %v2178 = vmul.f32 %v1877, %v2170
  %v2179 = vmul.f32 %v1882, %v2170
  %v2180 = vmul.f32 %v1887, %v2170
  %v2181 = vmul.f32 %v1892, %v2170
  %v2182 = vmul.f32 %v1897, %v2170
  %v2183 = vmul.f32 %v1902, %v2170
  %v2184 = vmul.f32 %v1907, %v2170
  %v2185 = vmul.f32 %v1912, %v2170
  %v2186 = vmul.f32 %v1917, %v2170
  %v2187 = vmul.f32 %v1922, %v2170
  %v2188 = vmul.f32 %v1927, %v2170
  %v2189 = vmul.f32 %v1932, %v2170
  %v2190 = vmul.f32 %v1937, %v2170
  %v2191 = vmul.f32 %v1942, %v2170
  %v2192 = vmul.f32 %v1947, %v2170
  %v2193 = vmul.f32 %v1952, %v2170
  %v2194 = vmul.f32 %v1957, %v2170
  %v2195 = vmul.f32 %v1962, %v2170
  %v2196 = vmul.f32 %v1967, %v2170
  %v2197 = vmul.f32 %v1972, %v2170
  %v2198 = vmul.f32 %v1977, %v2170
  %v2199 = vmul.f32 %v1982, %v2170
  %v2200 = vmul.f32 %v1987, %v2170
  %v2201 = vmul.f32 %v1992, %v2170
  %v2202 = vmul.f32 %v1997, %v2170
  %v2203 = vmul.f32 %v2002, %v2170
  %v2204 = vmul.f32 %v2007, %v2170
  %v2205 = vmul.f32 %v2012, %v2170
  %v2206 = vmul.f32 %v2017, %v2170
  %v2207 = vmul.f32 %v2022, %v2170
  %v2208 = vmul.f32 %v2027, %v2170
  %v2209 = vmul.f32 %v2032, %v2170
  %v2210 = vmul.f32 %v2037, %v2170
  %v2211 = vmul.f32 %v2042, %v2170
  %v2212 = vmul.f32 %v2047, %v2170
  %v2213 = vmul.f32 %v2052, %v2170
  %v2214 = vmul.f32 %v2057, %v2170
  %v2215 = vmul.f32 %v2062, %v2170
  %v2216 = vmul.f32 %v2067, %v2170
  %v2217 = vmul.f32 %v2072, %v2170
  %v2218 = vmul.f32 %v2077, %v2170
  %v2219 = vmul.f32 %v2082, %v2170
  %v2220 = vmul.f32 %v2087, %v2170
  %v2221 = vmul.f32 %v2092, %v2170
  %v2222 = vmul.f32 %v2097, %v2170
  %v2223 = vmul.f32 %v2102, %v2170
  %v2224 = vmul.f32 %v2107, %v2170
  %v2225 = vmul.f32 %v2112, %v2170
  %v2226 = vmul.f32 %v2117, %v2170
  %v2227 = vmul.f32 %v2122, %v2170
  %v2228 = vmul.f32 %v2127, %v2170
  %v2229 = vmul.f32 %v2132, %v2170
  %v2230 = vmul.f32 %v2137, %v2170
  %v2231 = vmul.f32 %v2142, %v2170
  %v2232 = vmul.f32 %v2147, %v2170
  %v2233 = vmul.f32 %v2152, %v2170
  %v2234 = vmul.f32 %v2157, %v2170
  %v2235 = vmul.f32 %v2162, %v2170
  %v2236 = vld [vmem:[%s6] sm:$0x1]
  %v2238 = vlaneseq
  %v2239 = vshrl.u32 %v2238, 7
  %v2240 = vsub.s32 0, %v2239
  %v2241 = vrot.slane %v2236, %v2240
  %v2243 = vadd.f32 %v2172, %v2241
  %v2244 = vadd.f32 %v2173, %v2241
  %v2245 = vadd.f32 %v2174, %v2241
  %v2246 = vadd.f32 %v2175, %v2241
  %v2247 = vadd.f32 %v2176, %v2241
  %v2248 = vadd.f32 %v2177, %v2241
  %v2249 = vadd.f32 %v2178, %v2241
  %v2250 = vadd.f32 %v2179, %v2241
  %v2251 = vadd.f32 %v2180, %v2241
  %v2252 = vadd.f32 %v2181, %v2241
  %v2253 = vadd.f32 %v2182, %v2241
  %v2254 = vadd.f32 %v2183, %v2241
  %v2255 = vadd.f32 %v2184, %v2241
  %v2256 = vadd.f32 %v2185, %v2241
  %v2257 = vadd.f32 %v2186, %v2241
  %v2258 = vadd.f32 %v2187, %v2241
  %v2259 = vadd.f32 %v2188, %v2241
  %v2260 = vadd.f32 %v2189, %v2241
  %v2261 = vadd.f32 %v2190, %v2241
  %v2262 = vadd.f32 %v2191, %v2241
  %v2263 = vadd.f32 %v2192, %v2241
  %v2264 = vadd.f32 %v2193, %v2241
  %v2265 = vadd.f32 %v2194, %v2241
  %v2266 = vadd.f32 %v2195, %v2241
  %v2267 = vadd.f32 %v2196, %v2241
  %v2268 = vadd.f32 %v2197, %v2241
  %v2269 = vadd.f32 %v2198, %v2241
  %v2270 = vadd.f32 %v2199, %v2241
  %v2271 = vadd.f32 %v2200, %v2241
  %v2272 = vadd.f32 %v2201, %v2241
  %v2273 = vadd.f32 %v2202, %v2241
  %v2274 = vadd.f32 %v2203, %v2241
  %v2275 = vadd.f32 %v2204, %v2241
  %v2276 = vadd.f32 %v2205, %v2241
  %v2277 = vadd.f32 %v2206, %v2241
  %v2278 = vadd.f32 %v2207, %v2241
  %v2279 = vadd.f32 %v2208, %v2241
  %v2280 = vadd.f32 %v2209, %v2241
  %v2281 = vadd.f32 %v2210, %v2241
  %v2282 = vadd.f32 %v2211, %v2241
  %v2283 = vadd.f32 %v2212, %v2241
  %v2284 = vadd.f32 %v2213, %v2241
  %v2285 = vadd.f32 %v2214, %v2241
  %v2286 = vadd.f32 %v2215, %v2241
  %v2287 = vadd.f32 %v2216, %v2241
  %v2288 = vadd.f32 %v2217, %v2241
  %v2289 = vadd.f32 %v2218, %v2241
  %v2290 = vadd.f32 %v2219, %v2241
  %v2291 = vadd.f32 %v2220, %v2241
  %v2292 = vadd.f32 %v2221, %v2241
  %v2293 = vadd.f32 %v2222, %v2241
  %v2294 = vadd.f32 %v2223, %v2241
  %v2295 = vadd.f32 %v2224, %v2241
  %v2296 = vadd.f32 %v2225, %v2241
  %v2297 = vadd.f32 %v2226, %v2241
  %v2298 = vadd.f32 %v2227, %v2241
  %v2299 = vadd.f32 %v2228, %v2241
  %v2300 = vadd.f32 %v2229, %v2241
  %v2301 = vadd.f32 %v2230, %v2241
  %v2302 = vadd.f32 %v2231, %v2241
  %v2303 = vadd.f32 %v2232, %v2241
  %v2304 = vadd.f32 %v2233, %v2241
  %v2305 = vadd.f32 %v2234, %v2241
  %v2306 = vadd.f32 %v2235, %v2241
  %v2307 = vxor.u32 %v2243, 2147483648
  %v2308 = vxor.u32 %v2244, 2147483648
  %v2309 = vxor.u32 %v2245, 2147483648
  %v2310 = vxor.u32 %v2246, 2147483648
  %v2311 = vxor.u32 %v2247, 2147483648
  %v2312 = vxor.u32 %v2248, 2147483648
  %v2313 = vxor.u32 %v2249, 2147483648
  %v2314 = vxor.u32 %v2250, 2147483648
  %v2315 = vxor.u32 %v2251, 2147483648
  %v2316 = vxor.u32 %v2252, 2147483648
  %v2317 = vxor.u32 %v2253, 2147483648
  %v2318 = vxor.u32 %v2254, 2147483648
  %v2319 = vxor.u32 %v2255, 2147483648
  %v2320 = vxor.u32 %v2256, 2147483648
  %v2321 = vxor.u32 %v2257, 2147483648
  %v2322 = vxor.u32 %v2258, 2147483648
  %v2323 = vxor.u32 %v2259, 2147483648
  %v2324 = vxor.u32 %v2260, 2147483648
  %v2325 = vxor.u32 %v2261, 2147483648
  %v2326 = vxor.u32 %v2262, 2147483648
  %v2327 = vxor.u32 %v2263, 2147483648
  %v2328 = vxor.u32 %v2264, 2147483648
  %v2329 = vxor.u32 %v2265, 2147483648
  %v2330 = vxor.u32 %v2266, 2147483648
  %v2331 = vxor.u32 %v2267, 2147483648
  %v2332 = vxor.u32 %v2268, 2147483648
  %v2333 = vxor.u32 %v2269, 2147483648
  %v2334 = vxor.u32 %v2270, 2147483648
  %v2335 = vxor.u32 %v2271, 2147483648
  %v2336 = vxor.u32 %v2272, 2147483648
  %v2337 = vxor.u32 %v2273, 2147483648
  %v2338 = vxor.u32 %v2274, 2147483648
  %v2339 = vxor.u32 %v2275, 2147483648
  %v2340 = vxor.u32 %v2276, 2147483648
  %v2341 = vxor.u32 %v2277, 2147483648
  %v2342 = vxor.u32 %v2278, 2147483648
  %v2343 = vxor.u32 %v2279, 2147483648
  %v2344 = vxor.u32 %v2280, 2147483648
  %v2345 = vxor.u32 %v2281, 2147483648
  %v2346 = vxor.u32 %v2282, 2147483648
  %v2347 = vxor.u32 %v2283, 2147483648
  %v2348 = vxor.u32 %v2284, 2147483648
  %v2349 = vxor.u32 %v2285, 2147483648
  %v2350 = vxor.u32 %v2286, 2147483648
  %v2351 = vxor.u32 %v2287, 2147483648
  %v2352 = vxor.u32 %v2288, 2147483648
  %v2353 = vxor.u32 %v2289, 2147483648
  %v2354 = vxor.u32 %v2290, 2147483648
  %v2355 = vxor.u32 %v2291, 2147483648
  %v2356 = vxor.u32 %v2292, 2147483648
  %v2357 = vxor.u32 %v2293, 2147483648
  %v2358 = vxor.u32 %v2294, 2147483648
  %v2359 = vxor.u32 %v2295, 2147483648
  %v2360 = vxor.u32 %v2296, 2147483648
  %v2361 = vxor.u32 %v2297, 2147483648
  %v2362 = vxor.u32 %v2298, 2147483648
  %v2363 = vxor.u32 %v2299, 2147483648
  %v2364 = vxor.u32 %v2300, 2147483648
  %v2365 = vxor.u32 %v2301, 2147483648
  %v2366 = vxor.u32 %v2302, 2147483648
  %v2367 = vxor.u32 %v2303, 2147483648
  %v2368 = vxor.u32 %v2304, 2147483648
  %v2369 = vxor.u32 %v2305, 2147483648
  %v2370 = vxor.u32 %v2306, 2147483648
  %v2371 = vmul.f32 %v2307, 1.442695
  %v2372 = vpow.pop %v2371
  %v2373 = vmul.f32 %v2308, 1.442695
  %v2374 = vpow.pop %v2373
  %v2375 = vmul.f32 %v2309, 1.442695
  %v2376 = vpow.pop %v2375
  %v2377 = vmul.f32 %v2310, 1.442695
  %v2378 = vpow.pop %v2377
  %v2379 = vmul.f32 %v2311, 1.442695
  %v2380 = vpow.pop %v2379
  %v2381 = vmul.f32 %v2312, 1.442695
  %v2382 = vpow.pop %v2381
  %v2383 = vmul.f32 %v2313, 1.442695
  %v2384 = vpow.pop %v2383
  %v2385 = vmul.f32 %v2314, 1.442695
  %v2386 = vpow.pop %v2385
  %v2387 = vmul.f32 %v2315, 1.442695
  %v2388 = vpow.pop %v2387
  %v2389 = vmul.f32 %v2316, 1.442695
  %v2390 = vpow.pop %v2389
  %v2391 = vmul.f32 %v2317, 1.442695
  %v2392 = vpow.pop %v2391
  %v2393 = vmul.f32 %v2318, 1.442695
  %v2394 = vpow.pop %v2393
  %v2395 = vmul.f32 %v2319, 1.442695
  %v2396 = vpow.pop %v2395
  %v2397 = vmul.f32 %v2320, 1.442695
  %v2398 = vpow.pop %v2397
  %v2399 = vmul.f32 %v2321, 1.442695
  %v2400 = vpow.pop %v2399
  %v2401 = vmul.f32 %v2322, 1.442695
  %v2402 = vpow.pop %v2401
  %v2403 = vmul.f32 %v2323, 1.442695
  %v2404 = vpow.pop %v2403
  %v2405 = vmul.f32 %v2324, 1.442695
  %v2406 = vpow.pop %v2405
  %v2407 = vmul.f32 %v2325, 1.442695
  %v2408 = vpow.pop %v2407
  %v2409 = vmul.f32 %v2326, 1.442695
  %v2410 = vpow.pop %v2409
  %v2411 = vmul.f32 %v2327, 1.442695
  %v2412 = vpow.pop %v2411
  %v2413 = vmul.f32 %v2328, 1.442695
  %v2414 = vpow.pop %v2413
  %v2415 = vmul.f32 %v2329, 1.442695
  %v2416 = vpow.pop %v2415
  %v2417 = vmul.f32 %v2330, 1.442695
  %v2418 = vpow.pop %v2417
  %v2419 = vmul.f32 %v2331, 1.442695
  %v2420 = vpow.pop %v2419
  %v2421 = vmul.f32 %v2332, 1.442695
  %v2422 = vpow.pop %v2421
  %v2423 = vmul.f32 %v2333, 1.442695
  %v2424 = vpow.pop %v2423
  %v2425 = vmul.f32 %v2334, 1.442695
  %v2426 = vpow.pop %v2425
  %v2427 = vmul.f32 %v2335, 1.442695
  %v2428 = vpow.pop %v2427
  %v2429 = vmul.f32 %v2336, 1.442695
  %v2430 = vpow.pop %v2429
  %v2431 = vmul.f32 %v2337, 1.442695
  %v2432 = vpow.pop %v2431
  %v2433 = vmul.f32 %v2338, 1.442695
  %v2434 = vpow.pop %v2433
  %v2435 = vmul.f32 %v2339, 1.442695
  %v2436 = vpow.pop %v2435
  %v2437 = vmul.f32 %v2340, 1.442695
  %v2438 = vpow.pop %v2437
  %v2439 = vmul.f32 %v2341, 1.442695
  %v2440 = vpow.pop %v2439
  %v2441 = vmul.f32 %v2342, 1.442695
  %v2442 = vpow.pop %v2441
  %v2443 = vmul.f32 %v2343, 1.442695
  %v2444 = vpow.pop %v2443
  %v2445 = vmul.f32 %v2344, 1.442695
  %v2446 = vpow.pop %v2445
  %v2447 = vmul.f32 %v2345, 1.442695
  %v2448 = vpow.pop %v2447
  %v2449 = vmul.f32 %v2346, 1.442695
  %v2450 = vpow.pop %v2449
  %v2451 = vmul.f32 %v2347, 1.442695
  %v2452 = vpow.pop %v2451
  %v2453 = vmul.f32 %v2348, 1.442695
  %v2454 = vpow.pop %v2453
  %v2455 = vmul.f32 %v2349, 1.442695
  %v2456 = vpow.pop %v2455
  %v2457 = vmul.f32 %v2350, 1.442695
  %v2458 = vpow.pop %v2457
  %v2459 = vmul.f32 %v2351, 1.442695
  %v2460 = vpow.pop %v2459
  %v2461 = vmul.f32 %v2352, 1.442695
  %v2462 = vpow.pop %v2461
  %v2463 = vmul.f32 %v2353, 1.442695
  %v2464 = vpow.pop %v2463
  %v2465 = vmul.f32 %v2354, 1.442695
  %v2466 = vpow.pop %v2465
  %v2467 = vmul.f32 %v2355, 1.442695
  %v2468 = vpow.pop %v2467
  %v2469 = vmul.f32 %v2356, 1.442695
  %v2470 = vpow.pop %v2469
  %v2471 = vmul.f32 %v2357, 1.442695
  %v2472 = vpow.pop %v2471
  %v2473 = vmul.f32 %v2358, 1.442695
  %v2474 = vpow.pop %v2473
  %v2475 = vmul.f32 %v2359, 1.442695
  %v2476 = vpow.pop %v2475
  %v2477 = vmul.f32 %v2360, 1.442695
  %v2478 = vpow.pop %v2477
  %v2479 = vmul.f32 %v2361, 1.442695
  %v2480 = vpow.pop %v2479
  %v2481 = vmul.f32 %v2362, 1.442695
  %v2482 = vpow.pop %v2481
  %v2483 = vmul.f32 %v2363, 1.442695
  %v2484 = vpow.pop %v2483
  %v2485 = vmul.f32 %v2364, 1.442695
  %v2486 = vpow.pop %v2485
  %v2487 = vmul.f32 %v2365, 1.442695
  %v2488 = vpow.pop %v2487
  %v2489 = vmul.f32 %v2366, 1.442695
  %v2490 = vpow.pop %v2489
  %v2491 = vmul.f32 %v2367, 1.442695
  %v2492 = vpow.pop %v2491
  %v2493 = vmul.f32 %v2368, 1.442695
  %v2494 = vpow.pop %v2493
  %v2495 = vmul.f32 %v2369, 1.442695
  %v2496 = vpow.pop %v2495
  %v2497 = vmul.f32 %v2370, 1.442695
  %v2498 = vpow.pop %v2497
  %v2499 = vadd.f32 %v2372, 1.0
  %v2500 = vadd.f32 %v2374, 1.0
  %v2501 = vadd.f32 %v2376, 1.0
  %v2502 = vadd.f32 %v2378, 1.0
  %v2503 = vadd.f32 %v2380, 1.0
  %v2504 = vadd.f32 %v2382, 1.0
  %v2505 = vadd.f32 %v2384, 1.0
  %v2506 = vadd.f32 %v2386, 1.0
  %v2507 = vadd.f32 %v2388, 1.0
  %v2508 = vadd.f32 %v2390, 1.0
  %v2509 = vadd.f32 %v2392, 1.0
  %v2510 = vadd.f32 %v2394, 1.0
  %v2511 = vadd.f32 %v2396, 1.0
  %v2512 = vadd.f32 %v2398, 1.0
  %v2513 = vadd.f32 %v2400, 1.0
  %v2514 = vadd.f32 %v2402, 1.0
  %v2515 = vadd.f32 %v2404, 1.0
  %v2516 = vadd.f32 %v2406, 1.0
  %v2517 = vadd.f32 %v2408, 1.0
  %v2518 = vadd.f32 %v2410, 1.0
  %v2519 = vadd.f32 %v2412, 1.0
  %v2520 = vadd.f32 %v2414, 1.0
  %v2521 = vadd.f32 %v2416, 1.0
  %v2522 = vadd.f32 %v2418, 1.0
  %v2523 = vadd.f32 %v2420, 1.0
  %v2524 = vadd.f32 %v2422, 1.0
  %v2525 = vadd.f32 %v2424, 1.0
  %v2526 = vadd.f32 %v2426, 1.0
  %v2527 = vadd.f32 %v2428, 1.0
  %v2528 = vadd.f32 %v2430, 1.0
  %v2529 = vadd.f32 %v2432, 1.0
  %v2530 = vadd.f32 %v2434, 1.0
  %v2531 = vadd.f32 %v2436, 1.0
  %v2532 = vadd.f32 %v2438, 1.0
  %v2533 = vadd.f32 %v2440, 1.0
  %v2534 = vadd.f32 %v2442, 1.0
  %v2535 = vadd.f32 %v2444, 1.0
  %v2536 = vadd.f32 %v2446, 1.0
  %v2537 = vadd.f32 %v2448, 1.0
  %v2538 = vadd.f32 %v2450, 1.0
  %v2539 = vadd.f32 %v2452, 1.0
  %v2540 = vadd.f32 %v2454, 1.0
  %v2541 = vadd.f32 %v2456, 1.0
  %v2542 = vadd.f32 %v2458, 1.0
  %v2543 = vadd.f32 %v2460, 1.0
  %v2544 = vadd.f32 %v2462, 1.0
  %v2545 = vadd.f32 %v2464, 1.0
  %v2546 = vadd.f32 %v2466, 1.0
  %v2547 = vadd.f32 %v2468, 1.0
  %v2548 = vadd.f32 %v2470, 1.0
  %v2549 = vadd.f32 %v2472, 1.0
  %v2550 = vadd.f32 %v2474, 1.0
  %v2551 = vadd.f32 %v2476, 1.0
  %v2552 = vadd.f32 %v2478, 1.0
  %v2553 = vadd.f32 %v2480, 1.0
  %v2554 = vadd.f32 %v2482, 1.0
  %v2555 = vadd.f32 %v2484, 1.0
  %v2556 = vadd.f32 %v2486, 1.0
  %v2557 = vadd.f32 %v2488, 1.0
  %v2558 = vadd.f32 %v2490, 1.0
  %v2559 = vadd.f32 %v2492, 1.0
  %v2560 = vadd.f32 %v2494, 1.0
  %v2561 = vadd.f32 %v2496, 1.0
  %v2562 = vadd.f32 %v2498, 1.0
  %v2563 = vrcp.pop %v2499
  %v2564 = vmul.f32 1.0, %v2563
  %v2565 = vrcp.pop %v2500
  %v2566 = vmul.f32 1.0, %v2565
  %v2567 = vrcp.pop %v2501
  %v2568 = vmul.f32 1.0, %v2567
  %v2569 = vrcp.pop %v2502
  %v2570 = vmul.f32 1.0, %v2569
  %v2571 = vrcp.pop %v2503
  %v2572 = vmul.f32 1.0, %v2571
  %v2573 = vrcp.pop %v2504
  %v2574 = vmul.f32 1.0, %v2573
  %v2575 = vrcp.pop %v2505
  %v2576 = vmul.f32 1.0, %v2575
  %v2577 = vrcp.pop %v2506
  %v2578 = vmul.f32 1.0, %v2577
  %v2579 = vrcp.pop %v2507
  %v2580 = vmul.f32 1.0, %v2579
  %v2581 = vrcp.pop %v2508
  %v2582 = vmul.f32 1.0, %v2581
  %v2583 = vrcp.pop %v2509
  %v2584 = vmul.f32 1.0, %v2583
  %v2585 = vrcp.pop %v2510
  %v2586 = vmul.f32 1.0, %v2585
  %v2587 = vrcp.pop %v2511
  %v2588 = vmul.f32 1.0, %v2587
  %v2589 = vrcp.pop %v2512
  %v2590 = vmul.f32 1.0, %v2589
  %v2591 = vrcp.pop %v2513
  %v2592 = vmul.f32 1.0, %v2591
  %v2593 = vrcp.pop %v2514
  %v2594 = vmul.f32 1.0, %v2593
  %v2595 = vrcp.pop %v2515
  %v2596 = vmul.f32 1.0, %v2595
  %v2597 = vrcp.pop %v2516
  %v2598 = vmul.f32 1.0, %v2597
  %v2599 = vrcp.pop %v2517
  %v2600 = vmul.f32 1.0, %v2599
  %v2601 = vrcp.pop %v2518
  %v2602 = vmul.f32 1.0, %v2601
  %v2603 = vrcp.pop %v2519
  %v2604 = vmul.f32 1.0, %v2603
  %v2605 = vrcp.pop %v2520
  %v2606 = vmul.f32 1.0, %v2605
  %v2607 = vrcp.pop %v2521
  %v2608 = vmul.f32 1.0, %v2607
  %v2609 = vrcp.pop %v2522
  %v2610 = vmul.f32 1.0, %v2609
  %v2611 = vrcp.pop %v2523
  %v2612 = vmul.f32 1.0, %v2611
  %v2613 = vrcp.pop %v2524
  %v2614 = vmul.f32 1.0, %v2613
  %v2615 = vrcp.pop %v2525
  %v2616 = vmul.f32 1.0, %v2615
  %v2617 = vrcp.pop %v2526
  %v2618 = vmul.f32 1.0, %v2617
  %v2619 = vrcp.pop %v2527
  %v2620 = vmul.f32 1.0, %v2619
  %v2621 = vrcp.pop %v2528
  %v2622 = vmul.f32 1.0, %v2621
  %v2623 = vrcp.pop %v2529
  %v2624 = vmul.f32 1.0, %v2623
  %v2625 = vrcp.pop %v2530
  %v2626 = vmul.f32 1.0, %v2625
  %v2627 = vrcp.pop %v2531
  %v2628 = vmul.f32 1.0, %v2627
  %v2629 = vrcp.pop %v2532
  %v2630 = vmul.f32 1.0, %v2629
  %v2631 = vrcp.pop %v2533
  %v2632 = vmul.f32 1.0, %v2631
  %v2633 = vrcp.pop %v2534
  %v2634 = vmul.f32 1.0, %v2633
  %v2635 = vrcp.pop %v2535
  %v2636 = vmul.f32 1.0, %v2635
  %v2637 = vrcp.pop %v2536
  %v2638 = vmul.f32 1.0, %v2637
  %v2639 = vrcp.pop %v2537
  %v2640 = vmul.f32 1.0, %v2639
  %v2641 = vrcp.pop %v2538
  %v2642 = vmul.f32 1.0, %v2641
  %v2643 = vrcp.pop %v2539
  %v2644 = vmul.f32 1.0, %v2643
  %v2645 = vrcp.pop %v2540
  %v2646 = vmul.f32 1.0, %v2645
  %v2647 = vrcp.pop %v2541
  %v2648 = vmul.f32 1.0, %v2647
  %v2649 = vrcp.pop %v2542
  %v2650 = vmul.f32 1.0, %v2649
  %v2651 = vrcp.pop %v2543
  %v2652 = vmul.f32 1.0, %v2651
  %v2653 = vrcp.pop %v2544
  %v2654 = vmul.f32 1.0, %v2653
  %v2655 = vrcp.pop %v2545
  %v2656 = vmul.f32 1.0, %v2655
  %v2657 = vrcp.pop %v2546
  %v2658 = vmul.f32 1.0, %v2657
  %v2659 = vrcp.pop %v2547
  %v2660 = vmul.f32 1.0, %v2659
  %v2661 = vrcp.pop %v2548
  %v2662 = vmul.f32 1.0, %v2661
  %v2663 = vrcp.pop %v2549
  %v2664 = vmul.f32 1.0, %v2663
  %v2665 = vrcp.pop %v2550
  %v2666 = vmul.f32 1.0, %v2665
  %v2667 = vrcp.pop %v2551
  %v2668 = vmul.f32 1.0, %v2667
  %v2669 = vrcp.pop %v2552
  %v2670 = vmul.f32 1.0, %v2669
  %v2671 = vrcp.pop %v2553
  %v2672 = vmul.f32 1.0, %v2671
  %v2673 = vrcp.pop %v2554
  %v2674 = vmul.f32 1.0, %v2673
  %v2675 = vrcp.pop %v2555
  %v2676 = vmul.f32 1.0, %v2675
  %v2677 = vrcp.pop %v2556
  %v2678 = vmul.f32 1.0, %v2677
  %v2679 = vrcp.pop %v2557
  %v2680 = vmul.f32 1.0, %v2679
  %v2681 = vrcp.pop %v2558
  %v2682 = vmul.f32 1.0, %v2681
  %v2683 = vrcp.pop %v2559
  %v2684 = vmul.f32 1.0, %v2683
  %v2685 = vrcp.pop %v2560
  %v2686 = vmul.f32 1.0, %v2685
  %v2687 = vrcp.pop %v2561
  %v2688 = vmul.f32 1.0, %v2687
  %v2689 = vrcp.pop %v2562
  %v2690 = vmul.f32 1.0, %v2689
  %v2691 = vmul.f32 %v2243, %v2564
  %v2692 = vmul.f32 %v2244, %v2566
  %v2693 = vmul.f32 %v2245, %v2568
  %v2694 = vmul.f32 %v2246, %v2570
  %v2695 = vmul.f32 %v2247, %v2572
  %v2696 = vmul.f32 %v2248, %v2574
  %v2697 = vmul.f32 %v2249, %v2576
  %v2698 = vmul.f32 %v2250, %v2578
  %v2699 = vmul.f32 %v2251, %v2580
  %v2700 = vmul.f32 %v2252, %v2582
  %v2701 = vmul.f32 %v2253, %v2584
  %v2702 = vmul.f32 %v2254, %v2586
  %v2703 = vmul.f32 %v2255, %v2588
  %v2704 = vmul.f32 %v2256, %v2590
  %v2705 = vmul.f32 %v2257, %v2592
  %v2706 = vmul.f32 %v2258, %v2594
  %v2707 = vmul.f32 %v2259, %v2596
  %v2708 = vmul.f32 %v2260, %v2598
  %v2709 = vmul.f32 %v2261, %v2600
  %v2710 = vmul.f32 %v2262, %v2602
  %v2711 = vmul.f32 %v2263, %v2604
  %v2712 = vmul.f32 %v2264, %v2606
  %v2713 = vmul.f32 %v2265, %v2608
  %v2714 = vmul.f32 %v2266, %v2610
  %v2715 = vmul.f32 %v2267, %v2612
  %v2716 = vmul.f32 %v2268, %v2614
  %v2717 = vmul.f32 %v2269, %v2616
  %v2718 = vmul.f32 %v2270, %v2618
  %v2719 = vmul.f32 %v2271, %v2620
  %v2720 = vmul.f32 %v2272, %v2622
  %v2721 = vmul.f32 %v2273, %v2624
  %v2722 = vmul.f32 %v2274, %v2626
  %v2723 = vmul.f32 %v2275, %v2628
  %v2724 = vmul.f32 %v2276, %v2630
  %v2725 = vmul.f32 %v2277, %v2632
  %v2726 = vmul.f32 %v2278, %v2634
  %v2727 = vmul.f32 %v2279, %v2636
  %v2728 = vmul.f32 %v2280, %v2638
  %v2729 = vmul.f32 %v2281, %v2640
  %v2730 = vmul.f32 %v2282, %v2642
  %v2731 = vmul.f32 %v2283, %v2644
  %v2732 = vmul.f32 %v2284, %v2646
  %v2733 = vmul.f32 %v2285, %v2648
  %v2734 = vmul.f32 %v2286, %v2650
  %v2735 = vmul.f32 %v2287, %v2652
  %v2736 = vmul.f32 %v2288, %v2654
  %v2737 = vmul.f32 %v2289, %v2656
  %v2738 = vmul.f32 %v2290, %v2658
  %v2739 = vmul.f32 %v2291, %v2660
  %v2740 = vmul.f32 %v2292, %v2662
  %v2741 = vmul.f32 %v2293, %v2664
  %v2742 = vmul.f32 %v2294, %v2666
  %v2743 = vmul.f32 %v2295, %v2668
  %v2744 = vmul.f32 %v2296, %v2670
  %v2745 = vmul.f32 %v2297, %v2672
  %v2746 = vmul.f32 %v2298, %v2674
  %v2747 = vmul.f32 %v2299, %v2676
  %v2748 = vmul.f32 %v2300, %v2678
  %v2749 = vmul.f32 %v2301, %v2680
  %v2750 = vmul.f32 %v2302, %v2682
  %v2751 = vmul.f32 %v2303, %v2684
  %v2752 = vmul.f32 %v2304, %v2686
  %v2753 = vmul.f32 %v2305, %v2688
  %v2754 = vmul.f32 %v2306, %v2690
  %2755 = vst.msk [vmem:[%s9] sm:$0xff] %vm1585, %v2691
  %2756 = vst.msk [vmem:[%s9 + $0x8] sm:$0xff] %vm1585, %v2692
  %2757 = vst.msk [vmem:[%s9 + $0x10] sm:$0xff] %vm1585, %v2693
  %2758 = vst.msk [vmem:[%s9 + $0x18] sm:$0xff] %vm1585, %v2694
  %2759 = vst.msk [vmem:[%s9 + $0x20] sm:$0xff] %vm1585, %v2695
  %2760 = vst.msk [vmem:[%s9 + $0x28] sm:$0xff] %vm1585, %v2696
  %2761 = vst.msk [vmem:[%s9 + $0x30] sm:$0xff] %vm1585, %v2697
  %2762 = vst.msk [vmem:[%s9 + $0x38] sm:$0xff] %vm1585, %v2698
  %2763 = vst.msk [vmem:[%s9 + $0x40] sm:$0xff] %vm1585, %v2699
  %2764 = vst.msk [vmem:[%s9 + $0x48] sm:$0xff] %vm1585, %v2700
  %2765 = vst.msk [vmem:[%s9 + $0x50] sm:$0xff] %vm1585, %v2701
  %2766 = vst.msk [vmem:[%s9 + $0x58] sm:$0xff] %vm1585, %v2702
  %2767 = vst.msk [vmem:[%s9 + $0x60] sm:$0xff] %vm1585, %v2703
  %2768 = vst.msk [vmem:[%s9 + $0x68] sm:$0xff] %vm1585, %v2704
  %2769 = vst.msk [vmem:[%s9 + $0x70] sm:$0xff] %vm1585, %v2705
  %2770 = vst.msk [vmem:[%s9 + $0x78] sm:$0xff] %vm1585, %v2706
  %2771 = vst.msk [vmem:[%s9 + $0x80] sm:$0xff] %vm1585, %v2707
  %2772 = vst.msk [vmem:[%s9 + $0x88] sm:$0xff] %vm1585, %v2708
  %2773 = vst.msk [vmem:[%s9 + $0x90] sm:$0xff] %vm1585, %v2709
  %2774 = vst.msk [vmem:[%s9 + $0x98] sm:$0xff] %vm1585, %v2710
  %2775 = vst.msk [vmem:[%s9 + $0xa0] sm:$0xff] %vm1585, %v2711
  %2776 = vst.msk [vmem:[%s9 + $0xa8] sm:$0xff] %vm1585, %v2712
  %2777 = vst.msk [vmem:[%s9 + $0xb0] sm:$0xff] %vm1585, %v2713
  %2778 = vst.msk [vmem:[%s9 + $0xb8] sm:$0xff] %vm1585, %v2714
  %2779 = vst.msk [vmem:[%s9 + $0xc0] sm:$0xff] %vm1585, %v2715
  %2780 = vst.msk [vmem:[%s9 + $0xc8] sm:$0xff] %vm1585, %v2716
  %2781 = vst.msk [vmem:[%s9 + $0xd0] sm:$0xff] %vm1585, %v2717
  %2782 = vst.msk [vmem:[%s9 + $0xd8] sm:$0xff] %vm1585, %v2718
  %2783 = vst.msk [vmem:[%s9 + $0xe0] sm:$0xff] %vm1585, %v2719
  %2784 = vst.msk [vmem:[%s9 + $0xe8] sm:$0xff] %vm1585, %v2720
  %2785 = vst.msk [vmem:[%s9 + $0xf0] sm:$0xff] %vm1585, %v2721
  %2786 = vst.msk [vmem:[%s9 + $0xf8] sm:$0xff] %vm1585, %v2722
  %2787 = vst.msk [vmem:[%s9 + $0x100] sm:$0xff] %vm1585, %v2723
  %2788 = vst.msk [vmem:[%s9 + $0x108] sm:$0xff] %vm1585, %v2724
  %2789 = vst.msk [vmem:[%s9 + $0x110] sm:$0xff] %vm1585, %v2725
  %2790 = vst.msk [vmem:[%s9 + $0x118] sm:$0xff] %vm1585, %v2726
  %2791 = vst.msk [vmem:[%s9 + $0x120] sm:$0xff] %vm1585, %v2727
  %2792 = vst.msk [vmem:[%s9 + $0x128] sm:$0xff] %vm1585, %v2728
  %2793 = vst.msk [vmem:[%s9 + $0x130] sm:$0xff] %vm1585, %v2729
  %2794 = vst.msk [vmem:[%s9 + $0x138] sm:$0xff] %vm1585, %v2730
  %2795 = vst.msk [vmem:[%s9 + $0x140] sm:$0xff] %vm1585, %v2731
  %2796 = vst.msk [vmem:[%s9 + $0x148] sm:$0xff] %vm1585, %v2732
  %2797 = vst.msk [vmem:[%s9 + $0x150] sm:$0xff] %vm1585, %v2733
  %2798 = vst.msk [vmem:[%s9 + $0x158] sm:$0xff] %vm1585, %v2734
  %2799 = vst.msk [vmem:[%s9 + $0x160] sm:$0xff] %vm1585, %v2735
  %2800 = vst.msk [vmem:[%s9 + $0x168] sm:$0xff] %vm1585, %v2736
  %2801 = vst.msk [vmem:[%s9 + $0x170] sm:$0xff] %vm1585, %v2737
  %2802 = vst.msk [vmem:[%s9 + $0x178] sm:$0xff] %vm1585, %v2738
  %2803 = vst.msk [vmem:[%s9 + $0x180] sm:$0xff] %vm1585, %v2739
  %2804 = vst.msk [vmem:[%s9 + $0x188] sm:$0xff] %vm1585, %v2740
  %2805 = vst.msk [vmem:[%s9 + $0x190] sm:$0xff] %vm1585, %v2741
  %2806 = vst.msk [vmem:[%s9 + $0x198] sm:$0xff] %vm1585, %v2742
  %2807 = vst.msk [vmem:[%s9 + $0x1a0] sm:$0xff] %vm1585, %v2743
  %2808 = vst.msk [vmem:[%s9 + $0x1a8] sm:$0xff] %vm1585, %v2744
  %2809 = vst.msk [vmem:[%s9 + $0x1b0] sm:$0xff] %vm1585, %v2745
  %2810 = vst.msk [vmem:[%s9 + $0x1b8] sm:$0xff] %vm1585, %v2746
  %2811 = vst.msk [vmem:[%s9 + $0x1c0] sm:$0xff] %vm1585, %v2747
  %2812 = vst.msk [vmem:[%s9 + $0x1c8] sm:$0xff] %vm1585, %v2748
  %2813 = vst.msk [vmem:[%s9 + $0x1d0] sm:$0xff] %vm1585, %v2749
  %2814 = vst.msk [vmem:[%s9 + $0x1d8] sm:$0xff] %vm1585, %v2750
  %2815 = vst.msk [vmem:[%s9 + $0x1e0] sm:$0xff] %vm1585, %v2751
  %2816 = vst.msk [vmem:[%s9 + $0x1e8] sm:$0xff] %vm1585, %v2752
  %2817 = vst.msk [vmem:[%s9 + $0x1f0] sm:$0xff] %vm1585, %v2753
  %2818 = vst.msk [vmem:[%s9 + $0x1f8] sm:$0xff] %vm1585, %v2754
  // Predicated region
  $region30: #{tpu_custom_call.1} parent=0 // pred_check
    _
  $region31: #{tpu_custom_call.1} parent=0 // pred_check_branch
    %2820 = sbr.rel (0) target = $region33
  $region32: #{tpu_custom_call.1} parent=0 // pred_region
    _
  $region33: #{tpu_custom_call.1} parent=0 // pred_fallthru
    _
  // Predicated region
  $region34: #{tpu_custom_call.1} parent=0 // pred_check
    _
  $region35: #{tpu_custom_call.1} parent=0 // pred_check_branch
    %2822 = sbr.rel (0) target = $region37
  $region36: #{tpu_custom_call.1} parent=0 // pred_region
    _
  $region37: #{tpu_custom_call.1} parent=0 // pred_fallthru
    _
  // Predicated region
  $region38: #{tpu_custom_call.1} parent=0 // pred_check
    _
  $region39: #{tpu_custom_call.1} parent=0 // pred_check_branch
    %2824 = sbr.rel (0) target = $region41
  $region40: #{tpu_custom_call.1} parent=0 // pred_region
    _
  $region41: #{tpu_custom_call.1} parent=0 // pred_fallthru
    _
  // Predicated region
  $region42: #{tpu_custom_call.1} parent=0 // pred_check
    _
  $region43: #{tpu_custom_call.1} parent=0 // pred_check_branch
    %2826 = sbr.rel (0) target = $region45
  $region44: #{tpu_custom_call.1} parent=0 // pred_region
    _
  $region45: #{tpu_custom_call.1} parent=0 // pred_fallthru
    _
  // Predicated region
  $region46: #{tpu_custom_call.1} parent=0 // pred_check
    _
  $region47: #{tpu_custom_call.1} parent=0 // pred_check_branch
    %2828 = sbr.rel (0) target = $region49
  $region48: #{tpu_custom_call.1} parent=0 // pred_region
    _
  $region49: #{tpu_custom_call.1} parent=0 // pred_fallthru
    _
  // Predicated region
  $region50: #{tpu_custom_call.1} parent=0 // pred_check
    _
  $region51: #{tpu_custom_call.1} parent=0 // pred_check_branch
    %2830 = sbr.rel (0) target = $region53
  $region52: #{tpu_custom_call.1} parent=0 // pred_region
    _
  $region53: #{tpu_custom_call.1} parent=0 // pred_fallthru
    _

</llo_original>
